<compile_context>
chip_gen: v7x
topology: tpu7x:2x2x1
jax: 0.10.0
libtpu: 0.0.40
codegen_flags: <defaults>
</compile_context>

<pallas_src>
import math

import jax
import jax.numpy as jnp
from jax.experimental import pallas as pl
from jax.experimental.pallas import tpu as pltpu

LANE = 128          # lane width / pad granularity for feature dims
DEF_TILE_B = 256    # batch tile: fills the 256-wide MXU on v6e/v7x (2x128 on v5e)


def _round_up(x, m):
    return (x + m - 1) // m * m


def _vmem_cap_bytes():
    """Per-TensorCore VMEM cap (~80% of capacity); conservative fallback."""
    try:
        cap = int(pltpu.get_tpu_info().vmem_capacity_bytes)
    except Exception:
        cap = 64 << 20              # v7x per-TC size -> safe everywhere
    return max(int(cap * 0.80), 16 << 20)


def _make_dense_nn_kernel(num_layers: int):
    """Fused kernel: all Linear layers on one VMEM-resident batch tile."""

    def kernel(*refs):
        # refs = (x_ref, w1_ref, b1_ref, ..., wL_ref, bL_ref, o_ref)
        x_ref = refs[0]
        o_ref = refs[-1]
        h = x_ref[...]  # bf16 (pre-padded) or f32 (aligned fast path) activations
        for layer in range(num_layers):
            w_ref = refs[1 + 2 * layer]
            b_ref = refs[2 + 2 * layer]
            # bf16 x bf16 MXU matmul with f32 accumulation; bias add on the VPU.
            h = jnp.dot(h.astype(w_ref.dtype), w_ref[...],
                        preferred_element_type=jnp.float32) + b_ref[...]
            # TODO(synk): training-mode Dropout(0.5) after each hidden Linear would
            # need pltpu.prng_seed + stateful_bernoulli; eval-mode identity here.
        o_ref[...] = h.astype(o_ref.dtype)  # lane-dense (tile_b, 128) bf16 store

    return kernel


def dense_nn_forward(x, params, *, tile_b=DEF_TILE_B):
    """Run DenseNN forward.

    Args:
      x: (batch, input_size) float32.
      params: list of (W, b), W shaped (out, in) (PyTorch convention), b (out,).

    Returns:
      (batch, 1) float32.
    """
    num_layers = len(params)
    batch, in_features = x.shape
    out_features = params[-1][0].shape[0]  # final Linear out_features == 1

    # ---- batch tiling --------------------------------------------------------
    # Shrink the tile for small batches (no wasted MXU passes / DMA on padded
    # zero rows), keep it >= 128 (MXU / megacore friendly, >=16 sublanes bf16).
    tile_b = max(min(tile_b, _round_up(max(batch, 1), LANE)), LANE)
    batch_pad = _round_up(max(batch, 1), tile_b)
    # v7x megacore: guarantee >=2 tiles on the "parallel" axis when there is
    # more than one tile's worth of useful rows.
    if batch_pad // tile_b == 1 and batch > LANE and tile_b > LANE:
        tile_b //= 2
        batch_pad = _round_up(batch, tile_b)
    n_b_tiles = batch_pad // tile_b

    in_pad = _round_up(in_features, LANE)

    # ---- x: skip the wrapper pad/cast HBM pass when already aligned ----------
    if batch_pad == batch and in_pad == in_features:
        x_p = x  # f32 straight into the kernel; cast to bf16 happens in VMEM
    else:
        x_p = jnp.zeros((batch_pad, in_pad), jnp.bfloat16)
        x_p = x_p.at[:batch, :in_features].set(x.astype(jnp.bfloat16))

    # ---- pad weights/biases to lane-aligned shapes (zero padding is exact) ---
    flat_args = [x_p]
    layer_dims = []
    k_prev = in_pad
    for w, b in params:
        w = jnp.asarray(w)
        b = jnp.asarray(b)
        o_dim, i_dim = w.shape
        k_pad = _round_up(i_dim, LANE)
        n_pad = _round_up(o_dim, LANE)
        assert k_pad == k_prev, "chained layer dims must match"
        w_p = jnp.zeros((k_pad, n_pad), jnp.bfloat16)
        w_p = w_p.at[:i_dim, :o_dim].set(w.T.astype(jnp.bfloat16))   # (in, out)
        b_p = jnp.zeros((1, n_pad), jnp.float32)
        b_p = b_p.at[0, :o_dim].set(b.astype(jnp.float32))
        flat_args.append(w_p)
        flat_args.append(b_p)
        layer_dims.append((k_pad, n_pad))
        k_prev = n_pad
    out_pad = layer_dims[-1][1]           # >= 128 -> lane-dense output slab
    max_n = max(n for _, n in layer_dims)

    weight_bytes = sum(k * n * 2 for k, n in layer_dims)             # bf16 resident
    bias_bytes = sum(n * 4 for _, n in layer_dims)
    x_tile_bytes = tile_b * in_pad * x_p.dtype.itemsize
    out_tile_bytes = tile_b * out_pad * 2                            # bf16 writeback
    act_tile_bytes = tile_b * max_n * 4
    vmem_cap = _vmem_cap_bytes()
    # TODO(synk): if weight_bytes alone exceeds the per-TC cap (hit first on v7x),
    # fall back to an N/K-tiled grid per layer instead of all-resident weights.

    flops = 2 * batch_pad * sum(k * n for k, n in layer_dims)
    bytes_accessed = (x_p.size * x_p.dtype.itemsize + weight_bytes + bias_bytes
                      + batch_pad * out_pad * 2)
    cost = pl.CostEstimate(flops=flops, transcendentals=0,
                           bytes_accessed=bytes_accessed)

    deep_x_buffer = (max_n <= 256) and (n_b_tiles >= 3)

    def _run(use_hints):
        w_kwargs = {}
        x_kwargs = {}
        if use_hints:
            # Constant index_map -> never re-fetched; single buffer saves VMEM.
            w_kwargs = dict(pipeline_mode=pl.Buffered(1))
            if deep_x_buffer:
                # Tiny per-tile compute: deeper x buffering hides HBM latency.
                x_kwargs = dict(pipeline_mode=pl.Buffered(3))

        in_specs = [pl.BlockSpec((tile_b, in_pad), lambda i: (i, 0), **x_kwargs)]
        for k_pad, n_pad in layer_dims:
            in_specs.append(pl.BlockSpec((k_pad, n_pad), lambda i: (0, 0), **w_kwargs))
            in_specs.append(pl.BlockSpec((1, n_pad), lambda i: (0, 0), **w_kwargs))
        out_specs = pl.BlockSpec((tile_b, out_pad), lambda i: (i, 0))

        w_bufs = 1 if use_hints else 2
        x_bufs = 3 if (use_hints and deep_x_buffer) else 2
        vmem_budget = (w_bufs * (weight_bytes + bias_bytes)
                       + x_bufs * x_tile_bytes
                       + 2 * out_tile_bytes
                       + 2 * act_tile_bytes
                       + (8 << 20))                                  # headroom
        vmem_budget = int(min(max(vmem_budget, 16 << 20), vmem_cap))

        return pl.pallas_call(
            _make_dense_nn_kernel(num_layers),
            out_shape=jax.ShapeDtypeStruct((batch_pad, out_pad), jnp.bfloat16),
            grid=(n_b_tiles,),
            in_specs=in_specs,
            out_specs=out_specs,
            compiler_params=pltpu.CompilerParams(
                dimension_semantics=("parallel",),   # batch tiles split across TCs
                vmem_limit_bytes=vmem_budget),
            cost_estimate=cost,
        )(*flat_args)

    try:
        out_p = _run(True)
    except Exception:
        # pipeline_mode buffering hints unsupported on this build: plain specs.
        out_p = _run(False)

    return out_p[:batch, :out_features].astype(jnp.float32)


def init_dense_nn_params(key, input_size, *hidden_sizes):
    """Deterministic init mirroring torch.nn.Linear's default U(-k, k), k=1/sqrt(fan_in)."""
    sizes = [input_size, *hidden_sizes]
    layer_dims = [(sizes[i], sizes[i + 1]) for i in range(len(sizes) - 1)]
    layer_dims.append((sizes[-1], 1))

    params = []
    for fan_in, fan_out in layer_dims:
        key, kw, kb = jax.random.split(key, 3)
        bound = 1.0 / math.sqrt(fan_in)
        w = jax.random.uniform(kw, (fan_out, fan_in), jnp.float32, -bound, bound)
        b = jax.random.uniform(kb, (fan_out,), jnp.float32, -bound, bound)
        params.append((w, b))
    return params


def dense_nn_reference_f32(x, params):
    """Pure-f32 reference (eval-mode dropout)."""
    h = x
    for w, b in params:
        h = h @ w.T + b
    return h


def dense_nn_reference_kernel_precision(x, params):
    """Reference mirroring the kernel's bf16-input / f32-accumulate / bf16-store path."""
    h = x.astype(jnp.float32)
    for w, b in params:
        h = jnp.dot(h.astype(jnp.bfloat16), w.T.astype(jnp.bfloat16),
                    preferred_element_type=jnp.float32) + b.astype(jnp.float32)
    return h.astype(jnp.bfloat16).astype(jnp.float32)


if __name__ == "__main__":
    key = jax.random.PRNGKey(0)
    key, kx = jax.random.split(key)

    batch = 8
    input_size = 32
    hidden_sizes = (64, 32)

    x = jax.random.normal(kx, (batch, input_size), jnp.float32)
    params = init_dense_nn_params(key, input_size, *hidden_sizes)

    out = dense_nn_forward(x, params)
    out = jax.block_until_ready(out)

    assert out.shape == (batch, 1), out.shape

    ref_kp = dense_nn_reference_kernel_precision(x, params)
    ref_f32 = dense_nn_reference_f32(x, params)
    assert jnp.allclose(out, ref_kp, atol=2e-3, rtol=2e-3), "mismatch vs bf16-precision ref"
    assert jnp.allclose(out, ref_f32, atol=5e-2, rtol=5e-2), "mismatch vs f32 ref"

    print("KERNEL_OK")
</pallas_src>

<mosaic_0001>
module attributes {stable_mosaic.version = 11 : i64} {
  func.func @kernel(%arg0: i32, %arg1: memref<128x128xbf16, #tpu.memory_space<vmem>>, %arg2: memref<128x128xbf16, #tpu.memory_space<vmem>>, %arg3: memref<1x128xf32, #tpu.memory_space<vmem>>, %arg4: memref<128x128xbf16, #tpu.memory_space<vmem>>, %arg5: memref<1x128xf32, #tpu.memory_space<vmem>>, %arg6: memref<128x128xbf16, #tpu.memory_space<vmem>>, %arg7: memref<1x128xf32, #tpu.memory_space<vmem>>, %arg8: memref<128x128xbf16, #tpu.memory_space<vmem>>) attributes {dimension_semantics = [#tpu.dimension_semantics<parallel>], iteration_bounds = array<i64: 1>, scalar_prefetch = 0 : i64, scratch_operands = 0 : i64, tpu.core_type = #tpu.core_type<tc>, window_params = [{transform_indices = @transform_0, window_bounds = array<i64: 128, 128>}, {pipeline_mode = #tpu.pipeline_mode<synchronous>, transform_indices = @transform_1, window_bounds = array<i64: 128, 128>}, {pipeline_mode = #tpu.pipeline_mode<synchronous>, transform_indices = @transform_2, window_bounds = array<i64: 1, 128>}, {pipeline_mode = #tpu.pipeline_mode<synchronous>, transform_indices = @transform_3, window_bounds = array<i64: 128, 128>}, {pipeline_mode = #tpu.pipeline_mode<synchronous>, transform_indices = @transform_4, window_bounds = array<i64: 1, 128>}, {pipeline_mode = #tpu.pipeline_mode<synchronous>, transform_indices = @transform_5, window_bounds = array<i64: 128, 128>}, {pipeline_mode = #tpu.pipeline_mode<synchronous>, transform_indices = @transform_6, window_bounds = array<i64: 1, 128>}, {transform_indices = @transform_7, window_bounds = array<i64: 128, 128>}]} {
    %c0 = arith.constant 0 : index
    %c0_0 = arith.constant 0 : index
    %0 = vector.load %arg1[%c0, %c0_0] : memref<128x128xbf16, #tpu.memory_space<vmem>>, vector<128x128xbf16>
    %c0_1 = arith.constant 0 : index
    %c0_2 = arith.constant 0 : index
    %1 = vector.load %arg2[%c0_1, %c0_2] : memref<128x128xbf16, #tpu.memory_space<vmem>>, vector<128x128xbf16>
    %cst = arith.constant dense<0.000000e+00> : vector<128x128xf32>
    %2 = tpu.matmul %0, %1, %cst {dimension_numbers = #tpu.dot_dimension_numbers<[1], [0], [0], [1], [0, 0, 1, 1], [], []>} : vector<128x128xbf16>, vector<128x128xbf16>, vector<128x128xf32> -> vector<128x128xf32>
    %c0_3 = arith.constant 0 : index
    %c0_4 = arith.constant 0 : index
    %3 = vector.load %arg3[%c0_3, %c0_4] : memref<1x128xf32, #tpu.memory_space<vmem>>, vector<1x128xf32>
    %4 = vector.broadcast %3 : vector<1x128xf32> to vector<128x128xf32>
    %5 = arith.addf %2, %4 : vector<128x128xf32>
    %6 = arith.truncf %5 : vector<128x128xf32> to vector<128x128xbf16>
    %c0_5 = arith.constant 0 : index
    %c0_6 = arith.constant 0 : index
    %7 = vector.load %arg4[%c0_5, %c0_6] : memref<128x128xbf16, #tpu.memory_space<vmem>>, vector<128x128xbf16>
    %cst_7 = arith.constant dense<0.000000e+00> : vector<128x128xf32>
    %8 = tpu.matmul %6, %7, %cst_7 {dimension_numbers = #tpu.dot_dimension_numbers<[1], [0], [0], [1], [0, 0, 1, 1], [], []>} : vector<128x128xbf16>, vector<128x128xbf16>, vector<128x128xf32> -> vector<128x128xf32>
    %c0_8 = arith.constant 0 : index
    %c0_9 = arith.constant 0 : index
    %9 = vector.load %arg5[%c0_8, %c0_9] : memref<1x128xf32, #tpu.memory_space<vmem>>, vector<1x128xf32>
    %10 = vector.broadcast %9 : vector<1x128xf32> to vector<128x128xf32>
    %11 = arith.addf %8, %10 : vector<128x128xf32>
    %12 = arith.truncf %11 : vector<128x128xf32> to vector<128x128xbf16>
    %c0_10 = arith.constant 0 : index
    %c0_11 = arith.constant 0 : index
    %13 = vector.load %arg6[%c0_10, %c0_11] : memref<128x128xbf16, #tpu.memory_space<vmem>>, vector<128x128xbf16>
    %cst_12 = arith.constant dense<0.000000e+00> : vector<128x128xf32>
    %14 = tpu.matmul %12, %13, %cst_12 {dimension_numbers = #tpu.dot_dimension_numbers<[1], [0], [0], [1], [0, 0, 1, 1], [], []>} : vector<128x128xbf16>, vector<128x128xbf16>, vector<128x128xf32> -> vector<128x128xf32>
    %c0_13 = arith.constant 0 : index
    %c0_14 = arith.constant 0 : index
    %15 = vector.load %arg7[%c0_13, %c0_14] : memref<1x128xf32, #tpu.memory_space<vmem>>, vector<1x128xf32>
    %16 = vector.broadcast %15 : vector<1x128xf32> to vector<128x128xf32>
    %17 = arith.addf %14, %16 : vector<128x128xf32>
    %18 = arith.truncf %17 : vector<128x128xf32> to vector<128x128xbf16>
    %c0_15 = arith.constant 0 : index
    %c0_16 = arith.constant 0 : index
    %19 = vector.load %arg8[%c0_15, %c0_16] : memref<128x128xbf16, #tpu.memory_space<vmem>>, vector<128x128xbf16>
    tpu.vector_store %arg8[%c0_15, %c0_16], %18 {strides = array<i32>} : memref<128x128xbf16, #tpu.memory_space<vmem>>, vector<128x128xbf16>,
    return
  }
  func.func @transform_0(%arg0: i32) -> (i32, i32) {
    %c0_i32 = arith.constant 0 : i32
    %c0_i32_0 = arith.constant 0 : i32
    return %arg0, %c0_i32 : i32, i32
  }
  func.func @transform_1(%arg0: i32) -> (i32, i32) {
    %c0_i32 = arith.constant 0 : i32
    %c0_i32_0 = arith.constant 0 : i32
    %c0_i32_1 = arith.constant 0 : i32
    return %c0_i32, %c0_i32_0 : i32, i32
  }
  func.func @transform_2(%arg0: i32) -> (i32, i32) {
    %c0_i32 = arith.constant 0 : i32
    %c0_i32_0 = arith.constant 0 : i32
    %c0_i32_1 = arith.constant 0 : i32
    return %c0_i32, %c0_i32_0 : i32, i32
  }
  func.func @transform_3(%arg0: i32) -> (i32, i32) {
    %c0_i32 = arith.constant 0 : i32
    %c0_i32_0 = arith.constant 0 : i32
    %c0_i32_1 = arith.constant 0 : i32
    return %c0_i32, %c0_i32_0 : i32, i32
  }
  func.func @transform_4(%arg0: i32) -> (i32, i32) {
    %c0_i32 = arith.constant 0 : i32
    %c0_i32_0 = arith.constant 0 : i32
    %c0_i32_1 = arith.constant 0 : i32
    return %c0_i32, %c0_i32_0 : i32, i32
  }
  func.func @transform_5(%arg0: i32) -> (i32, i32) {
    %c0_i32 = arith.constant 0 : i32
    %c0_i32_0 = arith.constant 0 : i32
    %c0_i32_1 = arith.constant 0 : i32
    return %c0_i32, %c0_i32_0 : i32, i32
  }
  func.func @transform_6(%arg0: i32) -> (i32, i32) {
    %c0_i32 = arith.constant 0 : i32
    %c0_i32_0 = arith.constant 0 : i32
    %c0_i32_1 = arith.constant 0 : i32
    return %c0_i32, %c0_i32_0 : i32, i32
  }
  func.func @transform_7(%arg0: i32) -> (i32, i32) {
    %c0_i32 = arith.constant 0 : i32
    %c0_i32_0 = arith.constant 0 : i32
    return %arg0, %c0_i32 : i32, i32
  }
}

module attributes {stable_mosaic.version = 11 : i64} {
  func.func @kernel(%arg0: i32, %arg1: memref<128x128xbf16, #tpu.memory_space<vmem>>, %arg2: memref<128x128xbf16, #tpu.memory_space<vmem>>, %arg3: memref<1x128xf32, #tpu.memory_space<vmem>>, %arg4: memref<128x128xbf16, #tpu.memory_space<vmem>>, %arg5: memref<1x128xf32, #tpu.memory_space<vmem>>, %arg6: memref<128x128xbf16, #tpu.memory_space<vmem>>, %arg7: memref<1x128xf32, #tpu.memory_space<vmem>>, %arg8: memref<128x128xbf16, #tpu.memory_space<vmem>>) attributes {dimension_semantics = [#tpu.dimension_semantics<parallel>], iteration_bounds = array<i64: 1>, scalar_prefetch = 0 : i64, scratch_operands = 0 : i64, tpu.core_type = #tpu.core_type<tc>, window_params = [{transform_indices = @transform_0, window_bounds = array<i64: 128, 128>}, {pipeline_mode = #tpu.pipeline_mode<synchronous>, transform_indices = @transform_1, window_bounds = array<i64: 128, 128>}, {pipeline_mode = #tpu.pipeline_mode<synchronous>, transform_indices = @transform_2, window_bounds = array<i64: 1, 128>}, {pipeline_mode = #tpu.pipeline_mode<synchronous>, transform_indices = @transform_3, window_bounds = array<i64: 128, 128>}, {pipeline_mode = #tpu.pipeline_mode<synchronous>, transform_indices = @transform_4, window_bounds = array<i64: 1, 128>}, {pipeline_mode = #tpu.pipeline_mode<synchronous>, transform_indices = @transform_5, window_bounds = array<i64: 128, 128>}, {pipeline_mode = #tpu.pipeline_mode<synchronous>, transform_indices = @transform_6, window_bounds = array<i64: 1, 128>}, {transform_indices = @transform_7, window_bounds = array<i64: 128, 128>}]} {
    %c0 = arith.constant 0 : index
    %c0_0 = arith.constant 0 : index
    %0 = vector.load %arg1[%c0, %c0_0] : memref<128x128xbf16, #tpu.memory_space<vmem>>, vector<128x128xbf16>
    %c0_1 = arith.constant 0 : index
    %c0_2 = arith.constant 0 : index
    %1 = vector.load %arg2[%c0_1, %c0_2] : memref<128x128xbf16, #tpu.memory_space<vmem>>, vector<128x128xbf16>
    %cst = arith.constant dense<0.000000e+00> : vector<128x128xf32>
    %2 = tpu.matmul %0, %1, %cst {dimension_numbers = #tpu.dot_dimension_numbers<[1], [0], [0], [1], [0, 0, 1, 1], [], []>} : vector<128x128xbf16>, vector<128x128xbf16>, vector<128x128xf32> -> vector<128x128xf32>
    %c0_3 = arith.constant 0 : index
    %c0_4 = arith.constant 0 : index
    %3 = vector.load %arg3[%c0_3, %c0_4] : memref<1x128xf32, #tpu.memory_space<vmem>>, vector<1x128xf32>
    %4 = vector.broadcast %3 : vector<1x128xf32> to vector<128x128xf32>
    %5 = arith.addf %2, %4 : vector<128x128xf32>
    %6 = arith.truncf %5 : vector<128x128xf32> to vector<128x128xbf16>
    %c0_5 = arith.constant 0 : index
    %c0_6 = arith.constant 0 : index
    %7 = vector.load %arg4[%c0_5, %c0_6] : memref<128x128xbf16, #tpu.memory_space<vmem>>, vector<128x128xbf16>
    %cst_7 = arith.constant dense<0.000000e+00> : vector<128x128xf32>
    %8 = tpu.matmul %6, %7, %cst_7 {dimension_numbers = #tpu.dot_dimension_numbers<[1], [0], [0], [1], [0, 0, 1, 1], [], []>} : vector<128x128xbf16>, vector<128x128xbf16>, vector<128x128xf32> -> vector<128x128xf32>
    %c0_8 = arith.constant 0 : index
    %c0_9 = arith.constant 0 : index
    %9 = vector.load %arg5[%c0_8, %c0_9] : memref<1x128xf32, #tpu.memory_space<vmem>>, vector<1x128xf32>
    %10 = vector.broadcast %9 : vector<1x128xf32> to vector<128x128xf32>
    %11 = arith.addf %8, %10 : vector<128x128xf32>
    %12 = arith.truncf %11 : vector<128x128xf32> to vector<128x128xbf16>
    %c0_10 = arith.constant 0 : index
    %c0_11 = arith.constant 0 : index
    %13 = vector.load %arg6[%c0_10, %c0_11] : memref<128x128xbf16, #tpu.memory_space<vmem>>, vector<128x128xbf16>
    %cst_12 = arith.constant dense<0.000000e+00> : vector<128x128xf32>
    %14 = tpu.matmul %12, %13, %cst_12 {dimension_numbers = #tpu.dot_dimension_numbers<[1], [0], [0], [1], [0, 0, 1, 1], [], []>} : vector<128x128xbf16>, vector<128x128xbf16>, vector<128x128xf32> -> vector<128x128xf32>
    %c0_13 = arith.constant 0 : index
    %c0_14 = arith.constant 0 : index
    %15 = vector.load %arg7[%c0_13, %c0_14] : memref<1x128xf32, #tpu.memory_space<vmem>>, vector<1x128xf32>
    %16 = vector.broadcast %15 : vector<1x128xf32> to vector<128x128xf32>
    %17 = arith.addf %14, %16 : vector<128x128xf32>
    %18 = arith.truncf %17 : vector<128x128xf32> to vector<128x128xbf16>
    %c0_15 = arith.constant 0 : index
    %c0_16 = arith.constant 0 : index
    %19 = vector.load %arg8[%c0_15, %c0_16] : memref<128x128xbf16, #tpu.memory_space<vmem>>, vector<128x128xbf16>
    tpu.vector_store %arg8[%c0_15, %c0_16], %18 {strides = array<i32>} : memref<128x128xbf16, #tpu.memory_space<vmem>>, vector<128x128xbf16>,
    return
  }
  func.func @transform_0(%arg0: i32) -> (i32, i32) {
    %c0_i32 = arith.constant 0 : i32
    %c0_i32_0 = arith.constant 0 : i32
    return %arg0, %c0_i32 : i32, i32
  }
  func.func @transform_1(%arg0: i32) -> (i32, i32) {
    %c0_i32 = arith.constant 0 : i32
    %c0_i32_0 = arith.constant 0 : i32
    %c0_i32_1 = arith.constant 0 : i32
    return %c0_i32, %c0_i32_0 : i32, i32
  }
  func.func @transform_2(%arg0: i32) -> (i32, i32) {
    %c0_i32 = arith.constant 0 : i32
    %c0_i32_0 = arith.constant 0 : i32
    %c0_i32_1 = arith.constant 0 : i32
    return %c0_i32, %c0_i32_0 : i32, i32
  }
  func.func @transform_3(%arg0: i32) -> (i32, i32) {
    %c0_i32 = arith.constant 0 : i32
    %c0_i32_0 = arith.constant 0 : i32
    %c0_i32_1 = arith.constant 0 : i32
    return %c0_i32, %c0_i32_0 : i32, i32
  }
  func.func @transform_4(%arg0: i32) -> (i32, i32) {
    %c0_i32 = arith.constant 0 : i32
    %c0_i32_0 = arith.constant 0 : i32
    %c0_i32_1 = arith.constant 0 : i32
    return %c0_i32, %c0_i32_0 : i32, i32
  }
  func.func @transform_5(%arg0: i32) -> (i32, i32) {
    %c0_i32 = arith.constant 0 : i32
    %c0_i32_0 = arith.constant 0 : i32
    %c0_i32_1 = arith.constant 0 : i32
    return %c0_i32, %c0_i32_0 : i32, i32
  }
  func.func @transform_6(%arg0: i32) -> (i32, i32) {
    %c0_i32 = arith.constant 0 : i32
    %c0_i32_0 = arith.constant 0 : i32
    %c0_i32_1 = arith.constant 0 : i32
    return %c0_i32, %c0_i32_0 : i32, i32
  }
  func.func @transform_7(%arg0: i32) -> (i32, i32) {
    %c0_i32 = arith.constant 0 : i32
    %c0_i32_0 = arith.constant 0 : i32
    return %arg0, %c0_i32 : i32, i32
  }
}

</mosaic_0001>

<llo_original>
// kernel: tpu_custom_call.1
$region0: #{tpu_custom_call.1}
  #allocation0 [shape = 'u32[]', space=smem, size = 0x4, offset = 0x4, fixed_abs, tag = 'smem constant byte address 0x4 - core index']
  #allocation1 [shape = 'u32[144,128]{1,0:T(1,128)}', space=vmem, size = 0x12000, scoped, tag = 'internal scratch']
  %s0 = inlined_call_operand.hbm [shape: bf16[128,128], index: 0, kind: input, shape index: {}]
  %s1 = inlined_call_operand.hbm [shape: bf16[128,128], index: 1, kind: input, shape index: {}]
  %s2 = inlined_call_operand.vmem [shape: f32[1,128], index: 2, kind: input, shape index: {}]
  %s3 = inlined_call_operand.hbm [shape: bf16[128,128], index: 3, kind: input, shape index: {}]
  %s4 = inlined_call_operand.vmem [shape: f32[1,128], index: 4, kind: input, shape index: {}]
  %s5 = inlined_call_operand.hbm [shape: bf16[128,128], index: 5, kind: input, shape index: {}]
  %s6 = inlined_call_operand.vmem [shape: f32[1,128], index: 6, kind: input, shape index: {}]
  %s7 = inlined_call_operand.hbm [shape: bf16[128,128], index: 7, kind: output, shape index: {}]
  %s8 = sld [smem:[#allocation0]]
  $region54: #{tpu_custom_call.1} parent=0
    _
  %s10 = ssub.s32 1, %s8
  %s11 = scalar_select 0, %s10, %s8
  $region1: #{tpu_custom_call.1} parent=0
    #allocation2 [shape = 'u8[32768]{0}', space=vmem, size = 0x8000, scoped, tag = 'input window, operand 0, single buffered']
    #allocation3 [shape = 's32[1]{0}', space=sflag, size = 0x4, scoped, tag = 'scoped memory for tpu_custom_call.1']
    #allocation4 [shape = 's32[1]{0}', space=sflag, size = 0x4, scoped, tag = 'scoped memory for tpu_custom_call.1']
    #allocation5 [shape = 'u8[32768]{0}', space=vmem, size = 0x8000, scoped, tag = 'input window, operand 1, single buffered']
    #allocation6 [shape = 's32[1]{0}', space=sflag, size = 0x4, scoped, tag = 'scoped memory for tpu_custom_call.1']
    #allocation7 [shape = 'u8[32768]{0}', space=vmem, size = 0x8000, scoped, tag = 'input window, operand 3, single buffered']
    #allocation8 [shape = 'u8[32768]{0}', space=vmem, size = 0x8000, scoped, tag = 'input window, operand 5, single buffered']
    #allocation9 [shape = 's32[1]{0}', space=sflag, size = 0x4, scoped, tag = 'scoped memory for tpu_custom_call.1']
    #allocation10 [shape = 'u8[32768]{0}', space=vmem, size = 0x8000, scoped, tag = 'output window, operand 0, single buffered']
    %12 = vsyncpa [#allocation3], 0
    %13 = vsyncpa [#allocation6], 0
    %14 = vsyncpa [#allocation9], 0
    %15 = vsyncpa [#allocation4], 0
    // Predicated region
    $region2: #{tpu_custom_call.1} parent=1 // pred_check
      _
    $region3: #{tpu_custom_call.1} parent=1 // pred_check_branch
      %17 = sbr.rel (0) target = $region5
    $region4: #{tpu_custom_call.1} parent=1 // pred_region
      %s19 = ssub.s32 1024, 1024
      %20 = vsyncadd [#allocation3], %s19
      %s21 = sshll.u32 [#allocation2], 4
      %s22 = int_to_ptr.vmem [resolvable:$true] %s21
      %27 = dma.hbm_to_vmem [thread:$0]  %s0, 1024, %s22, [#allocation3], 64, 64, 4
    $region5: #{tpu_custom_call.1} parent=1 // pred_fallthru
      _
    // Predicated region
    $region6: #{tpu_custom_call.1} parent=1 // pred_check
      _
    $region7: #{tpu_custom_call.1} parent=1 // pred_check_branch
      %29 = sbr.rel (0) target = $region9
    $region8: #{tpu_custom_call.1} parent=1 // pred_region
      %s31 = ssub.s32 1024, 1024
      %32 = vsyncadd [#allocation6], %s31
      %s33 = sshll.u32 [#allocation5], 4
      %s34 = int_to_ptr.vmem [resolvable:$true] %s33
      %39 = dma.hbm_to_vmem [thread:$0]  %s1, 1024, %s34, [#allocation6], 64, 64, 4
    $region9: #{tpu_custom_call.1} parent=1 // pred_fallthru
      _
    // Predicated region
    $region10: #{tpu_custom_call.1} parent=1 // pred_check
      _
    $region11: #{tpu_custom_call.1} parent=1 // pred_check_branch
      %41 = sbr.rel (0) target = $region13
    $region12: #{tpu_custom_call.1} parent=1 // pred_region
      _
    $region13: #{tpu_custom_call.1} parent=1 // pred_fallthru
      _
    // Predicated region
    $region14: #{tpu_custom_call.1} parent=1 // pred_check
      _
    $region15: #{tpu_custom_call.1} parent=1 // pred_check_branch
      %43 = sbr.rel (0) target = $region17
    $region16: #{tpu_custom_call.1} parent=1 // pred_region
      %s45 = ssub.s32 1024, 1024
      %46 = vsyncadd [#allocation6], %s45
      %s47 = sshll.u32 [#allocation7], 4
      %s48 = int_to_ptr.vmem [resolvable:$true] %s47
      %53 = dma.hbm_to_vmem [thread:$0]  %s3, 1024, %s48, [#allocation6], 64, 64, 4
    $region17: #{tpu_custom_call.1} parent=1 // pred_fallthru
      _
    // Predicated region
    $region18: #{tpu_custom_call.1} parent=1 // pred_check
      _
    $region19: #{tpu_custom_call.1} parent=1 // pred_check_branch
      %55 = sbr.rel (0) target = $region21
    $region20: #{tpu_custom_call.1} parent=1 // pred_region
      _
    $region21: #{tpu_custom_call.1} parent=1 // pred_fallthru
      _
    // Predicated region
    $region22: #{tpu_custom_call.1} parent=1 // pred_check
      _
    $region23: #{tpu_custom_call.1} parent=1 // pred_check_branch
      %57 = sbr.rel (0) target = $region25
    $region24: #{tpu_custom_call.1} parent=1 // pred_region
      %s59 = ssub.s32 1024, 1024
      %60 = vsyncadd [#allocation9], %s59
      %s61 = sshll.u32 [#allocation8], 4
      %s62 = int_to_ptr.vmem [resolvable:$true] %s61
      %67 = dma.hbm_to_vmem [thread:$0]  %s5, 1024, %s62, [#allocation9], 64, 64, 4
    $region25: #{tpu_custom_call.1} parent=1 // pred_fallthru
      _
    // Predicated region
    $region26: #{tpu_custom_call.1} parent=1 // pred_check
      _
    $region27: #{tpu_custom_call.1} parent=1 // pred_check_branch
      %69 = sbr.rel (0) target = $region29
    $region28: #{tpu_custom_call.1} parent=1 // pred_region
      _
    $region29: #{tpu_custom_call.1} parent=1 // pred_fallthru
      _
    // Predicated region
    $region30: #{tpu_custom_call.1} parent=1 // pred_check
      _
    $region31: #{tpu_custom_call.1} parent=1 // pred_check_branch
      %71 = sbr.rel (0) target = $region33
    $region32: #{tpu_custom_call.1} parent=1 // pred_region
      %72 = dma.done [#allocation3], 1024
    $region33: #{tpu_custom_call.1} parent=1 // pred_fallthru
      _
    // Predicated region
    $region34: #{tpu_custom_call.1} parent=1 // pred_check
      _
    $region35: #{tpu_custom_call.1} parent=1 // pred_check_branch
      %74 = sbr.rel (0) target = $region37
    $region36: #{tpu_custom_call.1} parent=1 // pred_region
      %75 = dma.done [#allocation6], 1024
    $region37: #{tpu_custom_call.1} parent=1 // pred_fallthru
      _
    // Predicated region
    $region38: #{tpu_custom_call.1} parent=1 // pred_check
      _
    $region39: #{tpu_custom_call.1} parent=1 // pred_check_branch
      %77 = sbr.rel (0) target = $region41
    $region40: #{tpu_custom_call.1} parent=1 // pred_region
      %78 = dma.done [#allocation6], 1024
    $region41: #{tpu_custom_call.1} parent=1 // pred_fallthru
      _
    // Predicated region
    $region42: #{tpu_custom_call.1} parent=1 // pred_check
      _
    $region43: #{tpu_custom_call.1} parent=1 // pred_check_branch
      %80 = sbr.rel (0) target = $region45
    $region44: #{tpu_custom_call.1} parent=1 // pred_region
      %81 = dma.done [#allocation9], 1024
    $region45: #{tpu_custom_call.1} parent=1 // pred_fallthru
      _
    %v83 = vld [vmem:[#allocation2] sm:$0xf]
    %v84 = vld [vmem:[#allocation2 + $0x4] sm:$0xf]
    %v85 = vld [vmem:[#allocation2 + $0x8] sm:$0xf]
    %v86 = vld [vmem:[#allocation2 + $0xc] sm:$0xf]
    %v87 = vld [vmem:[#allocation2 + $0x10] sm:$0xf]
    %v88 = vld [vmem:[#allocation2 + $0x14] sm:$0xf]
    %v89 = vld [vmem:[#allocation2 + $0x18] sm:$0xf]
    %v90 = vld [vmem:[#allocation2 + $0x1c] sm:$0xf]
    %v91 = vld [vmem:[#allocation2 + $0x20] sm:$0xf]
    %v92 = vld [vmem:[#allocation2 + $0x24] sm:$0xf]
    %v93 = vld [vmem:[#allocation2 + $0x28] sm:$0xf]
    %v94 = vld [vmem:[#allocation2 + $0x2c] sm:$0xf]
    %v95 = vld [vmem:[#allocation2 + $0x30] sm:$0xf]
    %v96 = vld [vmem:[#allocation2 + $0x34] sm:$0xf]
    %v97 = vld [vmem:[#allocation2 + $0x38] sm:$0xf]
    %v98 = vld [vmem:[#allocation2 + $0x3c] sm:$0xf]
    %v99 = vld [vmem:[#allocation5] sm:$0xf]
    %v100 = vld [vmem:[#allocation5 + $0x4] sm:$0xf]
    %v101 = vld [vmem:[#allocation5 + $0x8] sm:$0xf]
    %v102 = vld [vmem:[#allocation5 + $0xc] sm:$0xf]
    %v103 = vld [vmem:[#allocation5 + $0x10] sm:$0xf]
    %v104 = vld [vmem:[#allocation5 + $0x14] sm:$0xf]
    %v105 = vld [vmem:[#allocation5 + $0x18] sm:$0xf]
    %v106 = vld [vmem:[#allocation5 + $0x1c] sm:$0xf]
    %v107 = vld [vmem:[#allocation5 + $0x20] sm:$0xf]
    %v108 = vld [vmem:[#allocation5 + $0x24] sm:$0xf]
    %v109 = vld [vmem:[#allocation5 + $0x28] sm:$0xf]
    %v110 = vld [vmem:[#allocation5 + $0x2c] sm:$0xf]
    %v111 = vld [vmem:[#allocation5 + $0x30] sm:$0xf]
    %v112 = vld [vmem:[#allocation5 + $0x34] sm:$0xf]
    %v113 = vld [vmem:[#allocation5 + $0x38] sm:$0xf]
    %v114 = vld [vmem:[#allocation5 + $0x3c] sm:$0xf]
    %v115 = vld [vmem:[%s2] sm:$0x1]
    %v117 = vlaneseq
    %v118 = vshrl.u32 %v117, 7
    %v119 = vsub.s32 0, %v118
    %v120 = vrot.slane %v115, %v119
    %v138 = vunpack.c.l.b16 %v83
    %v139 = vunpack.c.l.b16 %v84
    %v140 = vunpack.c.l.b16 %v85
    %v141 = vunpack.c.l.b16 %v86
    %v142 = vunpack.c.l.b16 %v87
    %v143 = vunpack.c.l.b16 %v88
    %v144 = vunpack.c.l.b16 %v89
    %v145 = vunpack.c.l.b16 %v90
    %v146 = vunpack.c.l.b16 %v91
    %v147 = vunpack.c.l.b16 %v92
    %v148 = vunpack.c.l.b16 %v93
    %v149 = vunpack.c.l.b16 %v94
    %v150 = vunpack.c.l.b16 %v95
    %v151 = vunpack.c.l.b16 %v96
    %v152 = vunpack.c.l.b16 %v97
    %v153 = vunpack.c.l.b16 %v98
    %v154 = vpack.c.b16 %v139, %v138
    %v155 = vpack.c.b16 %v141, %v140
    %v156 = vpack.c.b16 %v143, %v142
    %v157 = vpack.c.b16 %v145, %v144
    %v158 = vpack.c.b16 %v147, %v146
    %v159 = vpack.c.b16 %v149, %v148
    %v160 = vpack.c.b16 %v151, %v150
    %v161 = vpack.c.b16 %v153, %v152
    %v186 = vunpack.c.l.b16 %v99
    %v187 = vunpack.c.l.b16 %v100
    %v188 = vunpack.c.l.b16 %v101
    %v189 = vunpack.c.l.b16 %v102
    %v190 = vunpack.c.l.b16 %v103
    %v191 = vunpack.c.l.b16 %v104
    %v192 = vunpack.c.l.b16 %v105
    %v193 = vunpack.c.l.b16 %v106
    %v194 = vunpack.c.l.b16 %v107
    %v195 = vunpack.c.l.b16 %v108
    %v196 = vunpack.c.l.b16 %v109
    %v197 = vunpack.c.l.b16 %v110
    %v198 = vunpack.c.l.b16 %v111
    %v199 = vunpack.c.l.b16 %v112
    %v200 = vunpack.c.l.b16 %v113
    %v201 = vunpack.c.l.b16 %v114
    %v202 = vpack.c.b16 %v187, %v186
    %v203 = vpack.c.b16 %v189, %v188
    %v204 = vpack.c.b16 %v191, %v190
    %v205 = vpack.c.b16 %v193, %v192
    %v206 = vpack.c.b16 %v195, %v194
    %v207 = vpack.c.b16 %v197, %v196
    %v208 = vpack.c.b16 %v199, %v198
    %v209 = vpack.c.b16 %v201, %v200
    %218 = vmatprep.subr.bf16.mxu0 0
    %219 = vmatpush1.bf16.msra.mxu0 %v202
    %220 = vmatprep.subr.bf16.mxu0 0
    %221 = vmatpush1.bf16.msra.mxu0 %v203
    %222 = vmatprep.subr.bf16.mxu0 0
    %223 = vmatpush1.bf16.msra.mxu0 %v204
    %224 = vmatprep.subr.bf16.mxu0 0
    %225 = vmatpush1.bf16.msra.mxu0 %v205
    %226 = vmatprep.subr.bf16.mxu0 0
    %227 = vmatpush1.bf16.msra.mxu0 %v206
    %228 = vmatprep.subr.bf16.mxu0 0
    %229 = vmatpush1.bf16.msra.mxu0 %v207
    %230 = vmatprep.subr.bf16.mxu0 0
    %231 = vmatpush1.bf16.msra.mxu0 %v208
    %232 = vmatprep.subr.bf16.mxu0 0
    %233 = vmatpush1.bf16.msra.mxu0 %v209
    %234 = vmatprep.subr.bf16.mxu0 0
    %235 = vmatpush1.bf16.msra.mxu0 0
    %236 = vmatprep.subr.bf16.mxu0 0
    %237 = vmatpush1.bf16.msra.mxu0 0
    %238 = vmatprep.subr.bf16.mxu0 0
    %239 = vmatpush1.bf16.msra.mxu0 0
    %240 = vmatprep.subr.bf16.mxu0 0
    %241 = vmatpush1.bf16.msra.mxu0 0
    %242 = vmatprep.subr.bf16.mxu0 0
    %243 = vmatpush1.bf16.msra.mxu0 0
    %244 = vmatprep.subr.bf16.mxu0 0
    %245 = vmatpush1.bf16.msra.mxu0 0
    %246 = vmatprep.subr.bf16.mxu0 0
    %247 = vmatpush1.bf16.msra.mxu0 0
    %248 = vmatprep.subr.bf16.mxu0 0
    %249 = vmatpush1.bf16.msra.mxu0 0
    %250 = vmatprep.mubr.bf16.mxu0 0
    %251 = vmatmul.mubr.bf16.gmra.mrb[0].mxu0 %v154
    %v252 = vpop.f32.mrb[0].mxu0
    %v253 = vadd.f32 %v120, %v252
    %v254 = vpop.f32.mrb[0].mxu0
    %v255 = vpop.f32.mrb[0].mxu0
    %v256 = vadd.f32 %v120, %v255
    %v257 = vpop.f32.mrb[0].mxu0
    %258 = vmatprep.mubr.bf16.mxu0 0
    %259 = vmatmul.mubr.bf16.gmra.mrb[0].mxu0 %v155
    %v260 = vpop.f32.mrb[0].mxu0
    %v261 = vadd.f32 %v120, %v260
    %v262 = vpop.f32.mrb[0].mxu0
    %v263 = vpop.f32.mrb[0].mxu0
    %v264 = vadd.f32 %v120, %v263
    %v265 = vpop.f32.mrb[0].mxu0
    %266 = vmatprep.mubr.bf16.mxu0 0
    %267 = vmatmul.mubr.bf16.gmra.mrb[0].mxu0 %v156
    %v268 = vpop.f32.mrb[0].mxu0
    %v269 = vadd.f32 %v120, %v268
    %v270 = vpop.f32.mrb[0].mxu0
    %v271 = vpop.f32.mrb[0].mxu0
    %v272 = vadd.f32 %v120, %v271
    %v273 = vpop.f32.mrb[0].mxu0
    %274 = vmatprep.mubr.bf16.mxu0 0
    %275 = vmatmul.mubr.bf16.gmra.mrb[0].mxu0 %v157
    %v276 = vpop.f32.mrb[0].mxu0
    %v277 = vadd.f32 %v120, %v276
    %v278 = vpop.f32.mrb[0].mxu0
    %v279 = vpop.f32.mrb[0].mxu0
    %v280 = vadd.f32 %v120, %v279
    %v281 = vpop.f32.mrb[0].mxu0
    %282 = vmatprep.mubr.bf16.mxu0 0
    %283 = vmatmul.mubr.bf16.gmra.mrb[0].mxu0 %v158
    %v284 = vpop.f32.mrb[0].mxu0
    %v285 = vadd.f32 %v120, %v284
    %v286 = vpop.f32.mrb[0].mxu0
    %v287 = vpop.f32.mrb[0].mxu0
    %v288 = vadd.f32 %v120, %v287
    %v289 = vpop.f32.mrb[0].mxu0
    %290 = vmatprep.mubr.bf16.mxu0 0
    %291 = vmatmul.mubr.bf16.gmra.mrb[0].mxu0 %v159
    %v292 = vpop.f32.mrb[0].mxu0
    %v293 = vadd.f32 %v120, %v292
    %v294 = vpop.f32.mrb[0].mxu0
    %v295 = vpop.f32.mrb[0].mxu0
    %v296 = vadd.f32 %v120, %v295
    %v297 = vpop.f32.mrb[0].mxu0
    %298 = vmatprep.mubr.bf16.mxu0 0
    %299 = vmatmul.mubr.bf16.gmra.mrb[0].mxu0 %v160
    %v300 = vpop.f32.mrb[0].mxu0
    %v301 = vadd.f32 %v120, %v300
    %v302 = vpop.f32.mrb[0].mxu0
    %v303 = vpop.f32.mrb[0].mxu0
    %v304 = vadd.f32 %v120, %v303
    %v305 = vpop.f32.mrb[0].mxu0
    %306 = vmatprep.mubr.bf16.mxu0 0
    %307 = vmatmul.mubr.bf16.gmra.mrb[0].mxu0 %v161
    %v308 = vpop.f32.mrb[0].mxu0
    %v309 = vadd.f32 %v120, %v308
    %v310 = vpop.f32.mrb[0].mxu0
    %v311 = vpop.f32.mrb[0].mxu0
    %v312 = vadd.f32 %v120, %v311
    %v313 = vpop.f32.mrb[0].mxu0
    %314 = vdwg.mxu0
    %v315 = vpack.c.bf16 %v256, %v253
    %v316 = vpack.c.bf16 %v264, %v261
    %v317 = vpack.c.bf16 %v272, %v269
    %v318 = vpack.c.bf16 %v280, %v277
    %v319 = vpack.c.bf16 %v288, %v285
    %v320 = vpack.c.bf16 %v296, %v293
    %v321 = vpack.c.bf16 %v304, %v301
    %v322 = vpack.c.bf16 %v312, %v309
    %v323 = vld [vmem:[#allocation7] sm:$0xf]
    %v324 = vld [vmem:[#allocation7 + $0x4] sm:$0xf]
    %v325 = vld [vmem:[#allocation7 + $0x8] sm:$0xf]
    %v326 = vld [vmem:[#allocation7 + $0xc] sm:$0xf]
    %v327 = vld [vmem:[#allocation7 + $0x10] sm:$0xf]
    %v328 = vld [vmem:[#allocation7 + $0x14] sm:$0xf]
    %v329 = vld [vmem:[#allocation7 + $0x18] sm:$0xf]
    %v330 = vld [vmem:[#allocation7 + $0x1c] sm:$0xf]
    %v331 = vld [vmem:[#allocation7 + $0x20] sm:$0xf]
    %v332 = vld [vmem:[#allocation7 + $0x24] sm:$0xf]
    %v333 = vld [vmem:[#allocation7 + $0x28] sm:$0xf]
    %v334 = vld [vmem:[#allocation7 + $0x2c] sm:$0xf]
    %v335 = vld [vmem:[#allocation7 + $0x30] sm:$0xf]
    %v336 = vld [vmem:[#allocation7 + $0x34] sm:$0xf]
    %v337 = vld [vmem:[#allocation7 + $0x38] sm:$0xf]
    %v338 = vld [vmem:[#allocation7 + $0x3c] sm:$0xf]
    %v339 = vld [vmem:[%s4] sm:$0x1]
    %v341 = vlaneseq
    %v342 = vshrl.u32 %v341, 7
    %v343 = vsub.s32 0, %v342
    %v344 = vrot.slane %v339, %v343
    %v362 = vunpack.c.l.b16 %v323
    %v363 = vunpack.c.l.b16 %v324
    %v364 = vunpack.c.l.b16 %v325
    %v365 = vunpack.c.l.b16 %v326
    %v366 = vunpack.c.l.b16 %v327
    %v367 = vunpack.c.l.b16 %v328
    %v368 = vunpack.c.l.b16 %v329
    %v369 = vunpack.c.l.b16 %v330
    %v370 = vunpack.c.l.b16 %v331
    %v371 = vunpack.c.l.b16 %v332
    %v372 = vunpack.c.l.b16 %v333
    %v373 = vunpack.c.l.b16 %v334
    %v374 = vunpack.c.l.b16 %v335
    %v375 = vunpack.c.l.b16 %v336
    %v376 = vunpack.c.l.b16 %v337
    %v377 = vunpack.c.l.b16 %v338
    %v378 = vpack.c.b16 %v363, %v362
    %v379 = vpack.c.b16 %v365, %v364
    %v380 = vpack.c.b16 %v367, %v366
    %v381 = vpack.c.b16 %v369, %v368
    %v382 = vpack.c.b16 %v371, %v370
    %v383 = vpack.c.b16 %v373, %v372
    %v384 = vpack.c.b16 %v375, %v374
    %v385 = vpack.c.b16 %v377, %v376
    %394 = vmatprep.subr.bf16.mxu0 0
    %395 = vmatpush1.bf16.msra.mxu0 %v378
    %396 = vmatprep.subr.bf16.mxu0 0
    %397 = vmatpush1.bf16.msra.mxu0 %v379
    %398 = vmatprep.subr.bf16.mxu0 0
    %399 = vmatpush1.bf16.msra.mxu0 %v380
    %400 = vmatprep.subr.bf16.mxu0 0
    %401 = vmatpush1.bf16.msra.mxu0 %v381
    %402 = vmatprep.subr.bf16.mxu0 0
    %403 = vmatpush1.bf16.msra.mxu0 %v382
    %404 = vmatprep.subr.bf16.mxu0 0
    %405 = vmatpush1.bf16.msra.mxu0 %v383
    %406 = vmatprep.subr.bf16.mxu0 0
    %407 = vmatpush1.bf16.msra.mxu0 %v384
    %408 = vmatprep.subr.bf16.mxu0 0
    %409 = vmatpush1.bf16.msra.mxu0 %v385
    %410 = vmatprep.subr.bf16.mxu0 0
    %411 = vmatpush1.bf16.msra.mxu0 0
    %412 = vmatprep.subr.bf16.mxu0 0
    %413 = vmatpush1.bf16.msra.mxu0 0
    %414 = vmatprep.subr.bf16.mxu0 0
    %415 = vmatpush1.bf16.msra.mxu0 0
    %416 = vmatprep.subr.bf16.mxu0 0
    %417 = vmatpush1.bf16.msra.mxu0 0
    %418 = vmatprep.subr.bf16.mxu0 0
    %419 = vmatpush1.bf16.msra.mxu0 0
    %420 = vmatprep.subr.bf16.mxu0 0
    %421 = vmatpush1.bf16.msra.mxu0 0
    %422 = vmatprep.subr.bf16.mxu0 0
    %423 = vmatpush1.bf16.msra.mxu0 0
    %424 = vmatprep.subr.bf16.mxu0 0
    %425 = vmatpush1.bf16.msra.mxu0 0
    %426 = vmatprep.mubr.bf16.mxu0 0
    %427 = vmatmul.mubr.bf16.gmra.mrb[0].mxu0 %v315
    %v428 = vpop.f32.mrb[0].mxu0
    %v429 = vadd.f32 %v344, %v428
    %v430 = vpop.f32.mrb[0].mxu0
    %v431 = vpop.f32.mrb[0].mxu0
    %v432 = vadd.f32 %v344, %v431
    %v433 = vpop.f32.mrb[0].mxu0
    %434 = vmatprep.mubr.bf16.mxu0 0
    %435 = vmatmul.mubr.bf16.gmra.mrb[0].mxu0 %v316
    %v436 = vpop.f32.mrb[0].mxu0
    %v437 = vadd.f32 %v344, %v436
    %v438 = vpop.f32.mrb[0].mxu0
    %v439 = vpop.f32.mrb[0].mxu0
    %v440 = vadd.f32 %v344, %v439
    %v441 = vpop.f32.mrb[0].mxu0
    %442 = vmatprep.mubr.bf16.mxu0 0
    %443 = vmatmul.mubr.bf16.gmra.mrb[0].mxu0 %v317
    %v444 = vpop.f32.mrb[0].mxu0
    %v445 = vadd.f32 %v344, %v444
    %v446 = vpop.f32.mrb[0].mxu0
    %v447 = vpop.f32.mrb[0].mxu0
    %v448 = vadd.f32 %v344, %v447
    %v449 = vpop.f32.mrb[0].mxu0
    %450 = vmatprep.mubr.bf16.mxu0 0
    %451 = vmatmul.mubr.bf16.gmra.mrb[0].mxu0 %v318
    %v452 = vpop.f32.mrb[0].mxu0
    %v453 = vadd.f32 %v344, %v452
    %v454 = vpop.f32.mrb[0].mxu0
    %v455 = vpop.f32.mrb[0].mxu0
    %v456 = vadd.f32 %v344, %v455
    %v457 = vpop.f32.mrb[0].mxu0
    %458 = vmatprep.mubr.bf16.mxu0 0
    %459 = vmatmul.mubr.bf16.gmra.mrb[0].mxu0 %v319
    %v460 = vpop.f32.mrb[0].mxu0
    %v461 = vadd.f32 %v344, %v460
    %v462 = vpop.f32.mrb[0].mxu0
    %v463 = vpop.f32.mrb[0].mxu0
    %v464 = vadd.f32 %v344, %v463
    %v465 = vpop.f32.mrb[0].mxu0
    %466 = vmatprep.mubr.bf16.mxu0 0
    %467 = vmatmul.mubr.bf16.gmra.mrb[0].mxu0 %v320
    %v468 = vpop.f32.mrb[0].mxu0
    %v469 = vadd.f32 %v344, %v468
    %v470 = vpop.f32.mrb[0].mxu0
    %v471 = vpop.f32.mrb[0].mxu0
    %v472 = vadd.f32 %v344, %v471
    %v473 = vpop.f32.mrb[0].mxu0
    %474 = vmatprep.mubr.bf16.mxu0 0
    %475 = vmatmul.mubr.bf16.gmra.mrb[0].mxu0 %v321
    %v476 = vpop.f32.mrb[0].mxu0
    %v477 = vadd.f32 %v344, %v476
    %v478 = vpop.f32.mrb[0].mxu0
    %v479 = vpop.f32.mrb[0].mxu0
    %v480 = vadd.f32 %v344, %v479
    %v481 = vpop.f32.mrb[0].mxu0
    %482 = vmatprep.mubr.bf16.mxu0 0
    %483 = vmatmul.mubr.bf16.gmra.mrb[0].mxu0 %v322
    %v484 = vpop.f32.mrb[0].mxu0
    %v485 = vadd.f32 %v344, %v484
    %v486 = vpop.f32.mrb[0].mxu0
    %v487 = vpop.f32.mrb[0].mxu0
    %v488 = vadd.f32 %v344, %v487
    %v489 = vpop.f32.mrb[0].mxu0
    %490 = vdwg.mxu0
    %v491 = vpack.c.bf16 %v432, %v429
    %v492 = vpack.c.bf16 %v440, %v437
    %v493 = vpack.c.bf16 %v448, %v445
    %v494 = vpack.c.bf16 %v456, %v453
    %v495 = vpack.c.bf16 %v464, %v461
    %v496 = vpack.c.bf16 %v472, %v469
    %v497 = vpack.c.bf16 %v480, %v477
    %v498 = vpack.c.bf16 %v488, %v485
    %v499 = vld [vmem:[#allocation8] sm:$0xf]
    %v500 = vld [vmem:[#allocation8 + $0x4] sm:$0xf]
    %v501 = vld [vmem:[#allocation8 + $0x8] sm:$0xf]
    %v502 = vld [vmem:[#allocation8 + $0xc] sm:$0xf]
    %v503 = vld [vmem:[#allocation8 + $0x10] sm:$0xf]
    %v504 = vld [vmem:[#allocation8 + $0x14] sm:$0xf]
    %v505 = vld [vmem:[#allocation8 + $0x18] sm:$0xf]
    %v506 = vld [vmem:[#allocation8 + $0x1c] sm:$0xf]
    %v507 = vld [vmem:[#allocation8 + $0x20] sm:$0xf]
    %v508 = vld [vmem:[#allocation8 + $0x24] sm:$0xf]
    %v509 = vld [vmem:[#allocation8 + $0x28] sm:$0xf]
    %v510 = vld [vmem:[#allocation8 + $0x2c] sm:$0xf]
    %v511 = vld [vmem:[#allocation8 + $0x30] sm:$0xf]
    %v512 = vld [vmem:[#allocation8 + $0x34] sm:$0xf]
    %v513 = vld [vmem:[#allocation8 + $0x38] sm:$0xf]
    %v514 = vld [vmem:[#allocation8 + $0x3c] sm:$0xf]
    %v515 = vld [vmem:[%s6] sm:$0x1]
    %v517 = vlaneseq
    %v518 = vshrl.u32 %v517, 7
    %v519 = vsub.s32 0, %v518
    %v520 = vrot.slane %v515, %v519
    %v538 = vunpack.c.l.b16 %v499
    %v539 = vunpack.c.l.b16 %v500
    %v540 = vunpack.c.l.b16 %v501
    %v541 = vunpack.c.l.b16 %v502
    %v542 = vunpack.c.l.b16 %v503
    %v543 = vunpack.c.l.b16 %v504
    %v544 = vunpack.c.l.b16 %v505
    %v545 = vunpack.c.l.b16 %v506
    %v546 = vunpack.c.l.b16 %v507
    %v547 = vunpack.c.l.b16 %v508
    %v548 = vunpack.c.l.b16 %v509
    %v549 = vunpack.c.l.b16 %v510
    %v550 = vunpack.c.l.b16 %v511
    %v551 = vunpack.c.l.b16 %v512
    %v552 = vunpack.c.l.b16 %v513
    %v553 = vunpack.c.l.b16 %v514
    %v554 = vpack.c.b16 %v539, %v538
    %v555 = vpack.c.b16 %v541, %v540
    %v556 = vpack.c.b16 %v543, %v542
    %v557 = vpack.c.b16 %v545, %v544
    %v558 = vpack.c.b16 %v547, %v546
    %v559 = vpack.c.b16 %v549, %v548
    %v560 = vpack.c.b16 %v551, %v550
    %v561 = vpack.c.b16 %v553, %v552
    %570 = vmatprep.subr.bf16.mxu0 0
    %571 = vmatpush1.bf16.msra.mxu0 %v554
    %572 = vmatprep.subr.bf16.mxu0 0
    %573 = vmatpush1.bf16.msra.mxu0 %v555
    %574 = vmatprep.subr.bf16.mxu0 0
    %575 = vmatpush1.bf16.msra.mxu0 %v556
    %576 = vmatprep.subr.bf16.mxu0 0
    %577 = vmatpush1.bf16.msra.mxu0 %v557
    %578 = vmatprep.subr.bf16.mxu0 0
    %579 = vmatpush1.bf16.msra.mxu0 %v558
    %580 = vmatprep.subr.bf16.mxu0 0
    %581 = vmatpush1.bf16.msra.mxu0 %v559
    %582 = vmatprep.subr.bf16.mxu0 0
    %583 = vmatpush1.bf16.msra.mxu0 %v560
    %584 = vmatprep.subr.bf16.mxu0 0
    %585 = vmatpush1.bf16.msra.mxu0 %v561
    %586 = vmatprep.subr.bf16.mxu0 0
    %587 = vmatpush1.bf16.msra.mxu0 0
    %588 = vmatprep.subr.bf16.mxu0 0
    %589 = vmatpush1.bf16.msra.mxu0 0
    %590 = vmatprep.subr.bf16.mxu0 0
    %591 = vmatpush1.bf16.msra.mxu0 0
    %592 = vmatprep.subr.bf16.mxu0 0
    %593 = vmatpush1.bf16.msra.mxu0 0
    %594 = vmatprep.subr.bf16.mxu0 0
    %595 = vmatpush1.bf16.msra.mxu0 0
    %596 = vmatprep.subr.bf16.mxu0 0
    %597 = vmatpush1.bf16.msra.mxu0 0
    %598 = vmatprep.subr.bf16.mxu0 0
    %599 = vmatpush1.bf16.msra.mxu0 0
    %600 = vmatprep.subr.bf16.mxu0 0
    %601 = vmatpush1.bf16.msra.mxu0 0
    %602 = vmatprep.mubr.bf16.mxu0 0
    %603 = vmatmul.mubr.bf16.gmra.mrb[0].mxu0 %v491
    %v604 = vpop.f32.mrb[0].mxu0
    %v605 = vadd.f32 %v520, %v604
    %v606 = vpop.f32.mrb[0].mxu0
    %v607 = vpop.f32.mrb[0].mxu0
    %v608 = vadd.f32 %v520, %v607
    %v609 = vpop.f32.mrb[0].mxu0
    %610 = vmatprep.mubr.bf16.mxu0 0
    %611 = vmatmul.mubr.bf16.gmra.mrb[0].mxu0 %v492
    %v612 = vpop.f32.mrb[0].mxu0
    %v613 = vadd.f32 %v520, %v612
    %v614 = vpop.f32.mrb[0].mxu0
    %v615 = vpop.f32.mrb[0].mxu0
    %v616 = vadd.f32 %v520, %v615
    %v617 = vpop.f32.mrb[0].mxu0
    %618 = vmatprep.mubr.bf16.mxu0 0
    %619 = vmatmul.mubr.bf16.gmra.mrb[0].mxu0 %v493
    %v620 = vpop.f32.mrb[0].mxu0
    %v621 = vadd.f32 %v520, %v620
    %v622 = vpop.f32.mrb[0].mxu0
    %v623 = vpop.f32.mrb[0].mxu0
    %v624 = vadd.f32 %v520, %v623
    %v625 = vpop.f32.mrb[0].mxu0
    %626 = vmatprep.mubr.bf16.mxu0 0
    %627 = vmatmul.mubr.bf16.gmra.mrb[0].mxu0 %v494
    %v628 = vpop.f32.mrb[0].mxu0
    %v629 = vadd.f32 %v520, %v628
    %v630 = vpop.f32.mrb[0].mxu0
    %v631 = vpop.f32.mrb[0].mxu0
    %v632 = vadd.f32 %v520, %v631
    %v633 = vpop.f32.mrb[0].mxu0
    %634 = vmatprep.mubr.bf16.mxu0 0
    %635 = vmatmul.mubr.bf16.gmra.mrb[0].mxu0 %v495
    %v636 = vpop.f32.mrb[0].mxu0
    %v637 = vadd.f32 %v520, %v636
    %v638 = vpop.f32.mrb[0].mxu0
    %v639 = vpop.f32.mrb[0].mxu0
    %v640 = vadd.f32 %v520, %v639
    %v641 = vpop.f32.mrb[0].mxu0
    %642 = vmatprep.mubr.bf16.mxu0 0
    %643 = vmatmul.mubr.bf16.gmra.mrb[0].mxu0 %v496
    %v644 = vpop.f32.mrb[0].mxu0
    %v645 = vadd.f32 %v520, %v644
    %v646 = vpop.f32.mrb[0].mxu0
    %v647 = vpop.f32.mrb[0].mxu0
    %v648 = vadd.f32 %v520, %v647
    %v649 = vpop.f32.mrb[0].mxu0
    %650 = vmatprep.mubr.bf16.mxu0 0
    %651 = vmatmul.mubr.bf16.gmra.mrb[0].mxu0 %v497
    %v652 = vpop.f32.mrb[0].mxu0
    %v653 = vadd.f32 %v520, %v652
    %v654 = vpop.f32.mrb[0].mxu0
    %v655 = vpop.f32.mrb[0].mxu0
    %v656 = vadd.f32 %v520, %v655
    %v657 = vpop.f32.mrb[0].mxu0
    %658 = vmatprep.mubr.bf16.mxu0 0
    %659 = vmatmul.mubr.bf16.gmra.mrb[0].mxu0 %v498
    %v660 = vpop.f32.mrb[0].mxu0
    %v661 = vadd.f32 %v520, %v660
    %v662 = vpop.f32.mrb[0].mxu0
    %v663 = vpop.f32.mrb[0].mxu0
    %v664 = vadd.f32 %v520, %v663
    %v665 = vpop.f32.mrb[0].mxu0
    %666 = vdwg.mxu0
    %v667 = vpack.c.bf16 %v608, %v605
    %v668 = vpack.c.bf16 %v616, %v613
    %v669 = vpack.c.bf16 %v624, %v621
    %v670 = vpack.c.bf16 %v632, %v629
    %v671 = vpack.c.bf16 %v640, %v637
    %v672 = vpack.c.bf16 %v648, %v645
    %v673 = vpack.c.bf16 %v656, %v653
    %v674 = vpack.c.bf16 %v664, %v661
    %v683 = vunpack.c.l.b16 %v667
    %v684 = vunpack.c.h.b16 %v667
    %v685 = vunpack.c.l.b16 %v668
    %v686 = vunpack.c.h.b16 %v668
    %v687 = vunpack.c.l.b16 %v669
    %v688 = vunpack.c.h.b16 %v669
    %v689 = vunpack.c.l.b16 %v670
    %v690 = vunpack.c.h.b16 %v670
    %v691 = vunpack.c.l.b16 %v671
    %v692 = vunpack.c.h.b16 %v671
    %v693 = vunpack.c.l.b16 %v672
    %v694 = vunpack.c.h.b16 %v672
    %v695 = vunpack.c.l.b16 %v673
    %v696 = vunpack.c.h.b16 %v673
    %v697 = vunpack.c.l.b16 %v674
    %v698 = vunpack.c.h.b16 %v674
    %v699 = vpack.c.b16 %v683, %v683
    %v700 = vpack.c.b16 %v684, %v684
    %v701 = vpack.c.b16 %v685, %v685
    %v702 = vpack.c.b16 %v686, %v686
    %v703 = vpack.c.b16 %v687, %v687
    %v704 = vpack.c.b16 %v688, %v688
    %v705 = vpack.c.b16 %v689, %v689
    %v706 = vpack.c.b16 %v690, %v690
    %v707 = vpack.c.b16 %v691, %v691
    %v708 = vpack.c.b16 %v692, %v692
    %v709 = vpack.c.b16 %v693, %v693
    %v710 = vpack.c.b16 %v694, %v694
    %v711 = vpack.c.b16 %v695, %v695
    %v712 = vpack.c.b16 %v696, %v696
    %v713 = vpack.c.b16 %v697, %v697
    %v714 = vpack.c.b16 %v698, %v698
    %731 = vst [vmem:[#allocation10] sm:$0xf] %v699
    %732 = vst [vmem:[#allocation10 + $0x4] sm:$0xf] %v700
    %733 = vst [vmem:[#allocation10 + $0x8] sm:$0xf] %v701
    %734 = vst [vmem:[#allocation10 + $0xc] sm:$0xf] %v702
    %735 = vst [vmem:[#allocation10 + $0x10] sm:$0xf] %v703
    %736 = vst [vmem:[#allocation10 + $0x14] sm:$0xf] %v704
    %737 = vst [vmem:[#allocation10 + $0x18] sm:$0xf] %v705
    %738 = vst [vmem:[#allocation10 + $0x1c] sm:$0xf] %v706
    %739 = vst [vmem:[#allocation10 + $0x20] sm:$0xf] %v707
    %740 = vst [vmem:[#allocation10 + $0x24] sm:$0xf] %v708
    %741 = vst [vmem:[#allocation10 + $0x28] sm:$0xf] %v709
    %742 = vst [vmem:[#allocation10 + $0x2c] sm:$0xf] %v710
    %743 = vst [vmem:[#allocation10 + $0x30] sm:$0xf] %v711
    %744 = vst [vmem:[#allocation10 + $0x34] sm:$0xf] %v712
    %745 = vst [vmem:[#allocation10 + $0x38] sm:$0xf] %v713
    %746 = vst [vmem:[#allocation10 + $0x3c] sm:$0xf] %v714
    // Predicated region
    $region46: #{tpu_custom_call.1} parent=1 // pred_check
      _
    $region47: #{tpu_custom_call.1} parent=1 // pred_check_branch
      %748 = sbr.rel (0) target = $region49
    $region48: #{tpu_custom_call.1} parent=1 // pred_region
      %s750 = ssub.s32 1024, 1024
      %751 = vsyncadd [#allocation4], %s750
      %s752 = sshll.u32 [#allocation10], 4
      %s753 = int_to_ptr.vmem [resolvable:$true] %s752
      %758 = dma.vmem_to_hbm [thread:$0]  %s753, 1024, %s7, [#allocation4], 64, 64, 4
    $region49: #{tpu_custom_call.1} parent=1 // pred_fallthru
      _
    // Predicated region
    $region50: #{tpu_custom_call.1} parent=1 // pred_check
      _
    $region51: #{tpu_custom_call.1} parent=1 // pred_check_branch
      %760 = sbr.rel (0) target = $region53
    $region52: #{tpu_custom_call.1} parent=1 // pred_region
      %761 = dma.done [#allocation4], 1024
    $region53: #{tpu_custom_call.1} parent=1 // pred_fallthru
      _
    %762 = vsyncpa [#allocation3], 1
    %763 = vsyncpa [#allocation6], 1
    %764 = vsyncpa [#allocation9], 1
    %765 = vsyncpa [#allocation4], 1

// kernel: tpu_custom_call.1
$region0: #{tpu_custom_call.1}
  #allocation0 [shape = 'u32[]', space=smem, size = 0x4, offset = 0x4, fixed_abs, tag = 'smem constant byte address 0x4 - core index']
  #allocation1 [shape = 'u32[144,128]{1,0:T(1,128)}', space=vmem, size = 0x12000, scoped, tag = 'internal scratch']
  %s0 = inlined_call_operand.hbm [shape: bf16[128,128], index: 0, kind: input, shape index: {}]
  %s1 = inlined_call_operand.hbm [shape: bf16[128,128], index: 1, kind: input, shape index: {}]
  %s2 = inlined_call_operand.vmem [shape: f32[1,128], index: 2, kind: input, shape index: {}]
  %s3 = inlined_call_operand.hbm [shape: bf16[128,128], index: 3, kind: input, shape index: {}]
  %s4 = inlined_call_operand.vmem [shape: f32[1,128], index: 4, kind: input, shape index: {}]
  %s5 = inlined_call_operand.hbm [shape: bf16[128,128], index: 5, kind: input, shape index: {}]
  %s6 = inlined_call_operand.vmem [shape: f32[1,128], index: 6, kind: input, shape index: {}]
  %s7 = inlined_call_operand.hbm [shape: bf16[128,128], index: 7, kind: output, shape index: {}]
  %s8 = sld [smem:[#allocation0]]
  $region54: #{tpu_custom_call.1} parent=0
    _
  %s10 = ssub.s32 1, %s8
  %s11 = scalar_select 0, %s10, %s8
  $region1: #{tpu_custom_call.1} parent=0
    #allocation2 [shape = 'u8[32768]{0}', space=vmem, size = 0x8000, scoped, tag = 'input window, operand 0, single buffered']
    #allocation3 [shape = 's32[1]{0}', space=sflag, size = 0x4, scoped, tag = 'scoped memory for tpu_custom_call.1']
    #allocation4 [shape = 's32[1]{0}', space=sflag, size = 0x4, scoped, tag = 'scoped memory for tpu_custom_call.1']
    #allocation5 [shape = 'u8[32768]{0}', space=vmem, size = 0x8000, scoped, tag = 'input window, operand 1, single buffered']
    #allocation6 [shape = 's32[1]{0}', space=sflag, size = 0x4, scoped, tag = 'scoped memory for tpu_custom_call.1']
    #allocation7 [shape = 'u8[32768]{0}', space=vmem, size = 0x8000, scoped, tag = 'input window, operand 3, single buffered']
    #allocation8 [shape = 'u8[32768]{0}', space=vmem, size = 0x8000, scoped, tag = 'input window, operand 5, single buffered']
    #allocation9 [shape = 's32[1]{0}', space=sflag, size = 0x4, scoped, tag = 'scoped memory for tpu_custom_call.1']
    #allocation10 [shape = 'u8[32768]{0}', space=vmem, size = 0x8000, scoped, tag = 'output window, operand 0, single buffered']
    %12 = vsyncpa [#allocation3], 0
    %13 = vsyncpa [#allocation6], 0
    %14 = vsyncpa [#allocation9], 0
    %15 = vsyncpa [#allocation4], 0
    // Predicated region
    $region2: #{tpu_custom_call.1} parent=1 // pred_check
      _
    $region3: #{tpu_custom_call.1} parent=1 // pred_check_branch
      %17 = sbr.rel (0) target = $region5
    $region4: #{tpu_custom_call.1} parent=1 // pred_region
      %s19 = ssub.s32 1024, 1024
      %20 = vsyncadd [#allocation3], %s19
      %s21 = sshll.u32 [#allocation2], 4
      %s22 = int_to_ptr.vmem [resolvable:$true] %s21
      %27 = dma.hbm_to_vmem [thread:$0]  %s0, 1024, %s22, [#allocation3], 64, 64, 4
    $region5: #{tpu_custom_call.1} parent=1 // pred_fallthru
      _
    // Predicated region
    $region6: #{tpu_custom_call.1} parent=1 // pred_check
      _
    $region7: #{tpu_custom_call.1} parent=1 // pred_check_branch
      %29 = sbr.rel (0) target = $region9
    $region8: #{tpu_custom_call.1} parent=1 // pred_region
      %s31 = ssub.s32 1024, 1024
      %32 = vsyncadd [#allocation6], %s31
      %s33 = sshll.u32 [#allocation5], 4
      %s34 = int_to_ptr.vmem [resolvable:$true] %s33
      %39 = dma.hbm_to_vmem [thread:$0]  %s1, 1024, %s34, [#allocation6], 64, 64, 4
    $region9: #{tpu_custom_call.1} parent=1 // pred_fallthru
      _
    // Predicated region
    $region10: #{tpu_custom_call.1} parent=1 // pred_check
      _
    $region11: #{tpu_custom_call.1} parent=1 // pred_check_branch
      %41 = sbr.rel (0) target = $region13
    $region12: #{tpu_custom_call.1} parent=1 // pred_region
      _
    $region13: #{tpu_custom_call.1} parent=1 // pred_fallthru
      _
    // Predicated region
    $region14: #{tpu_custom_call.1} parent=1 // pred_check
      _
    $region15: #{tpu_custom_call.1} parent=1 // pred_check_branch
      %43 = sbr.rel (0) target = $region17
    $region16: #{tpu_custom_call.1} parent=1 // pred_region
      %s45 = ssub.s32 1024, 1024
      %46 = vsyncadd [#allocation6], %s45
      %s47 = sshll.u32 [#allocation7], 4
      %s48 = int_to_ptr.vmem [resolvable:$true] %s47
      %53 = dma.hbm_to_vmem [thread:$0]  %s3, 1024, %s48, [#allocation6], 64, 64, 4
    $region17: #{tpu_custom_call.1} parent=1 // pred_fallthru
      _
    // Predicated region
    $region18: #{tpu_custom_call.1} parent=1 // pred_check
      _
    $region19: #{tpu_custom_call.1} parent=1 // pred_check_branch
      %55 = sbr.rel (0) target = $region21
    $region20: #{tpu_custom_call.1} parent=1 // pred_region
      _
    $region21: #{tpu_custom_call.1} parent=1 // pred_fallthru
      _
    // Predicated region
    $region22: #{tpu_custom_call.1} parent=1 // pred_check
      _
    $region23: #{tpu_custom_call.1} parent=1 // pred_check_branch
      %57 = sbr.rel (0) target = $region25
    $region24: #{tpu_custom_call.1} parent=1 // pred_region
      %s59 = ssub.s32 1024, 1024
      %60 = vsyncadd [#allocation9], %s59
      %s61 = sshll.u32 [#allocation8], 4
      %s62 = int_to_ptr.vmem [resolvable:$true] %s61
      %67 = dma.hbm_to_vmem [thread:$0]  %s5, 1024, %s62, [#allocation9], 64, 64, 4
    $region25: #{tpu_custom_call.1} parent=1 // pred_fallthru
      _
    // Predicated region
    $region26: #{tpu_custom_call.1} parent=1 // pred_check
      _
    $region27: #{tpu_custom_call.1} parent=1 // pred_check_branch
      %69 = sbr.rel (0) target = $region29
    $region28: #{tpu_custom_call.1} parent=1 // pred_region
      _
    $region29: #{tpu_custom_call.1} parent=1 // pred_fallthru
      _
    // Predicated region
    $region30: #{tpu_custom_call.1} parent=1 // pred_check
      _
    $region31: #{tpu_custom_call.1} parent=1 // pred_check_branch
      %71 = sbr.rel (0) target = $region33
    $region32: #{tpu_custom_call.1} parent=1 // pred_region
      %72 = dma.done [#allocation3], 1024
    $region33: #{tpu_custom_call.1} parent=1 // pred_fallthru
      _
    // Predicated region
    $region34: #{tpu_custom_call.1} parent=1 // pred_check
      _
    $region35: #{tpu_custom_call.1} parent=1 // pred_check_branch
      %74 = sbr.rel (0) target = $region37
    $region36: #{tpu_custom_call.1} parent=1 // pred_region
      %75 = dma.done [#allocation6], 1024
    $region37: #{tpu_custom_call.1} parent=1 // pred_fallthru
      _
    // Predicated region
    $region38: #{tpu_custom_call.1} parent=1 // pred_check
      _
    $region39: #{tpu_custom_call.1} parent=1 // pred_check_branch
      %77 = sbr.rel (0) target = $region41
    $region40: #{tpu_custom_call.1} parent=1 // pred_region
      %78 = dma.done [#allocation6], 1024
    $region41: #{tpu_custom_call.1} parent=1 // pred_fallthru
      _
    // Predicated region
    $region42: #{tpu_custom_call.1} parent=1 // pred_check
      _
    $region43: #{tpu_custom_call.1} parent=1 // pred_check_branch
      %80 = sbr.rel (0) target = $region45
    $region44: #{tpu_custom_call.1} parent=1 // pred_region
      %81 = dma.done [#allocation9], 1024
    $region45: #{tpu_custom_call.1} parent=1 // pred_fallthru
      _
    %v83 = vld [vmem:[#allocation2] sm:$0xf]
    %v84 = vld [vmem:[#allocation2 + $0x4] sm:$0xf]
    %v85 = vld [vmem:[#allocation2 + $0x8] sm:$0xf]
    %v86 = vld [vmem:[#allocation2 + $0xc] sm:$0xf]
    %v87 = vld [vmem:[#allocation2 + $0x10] sm:$0xf]
    %v88 = vld [vmem:[#allocation2 + $0x14] sm:$0xf]
    %v89 = vld [vmem:[#allocation2 + $0x18] sm:$0xf]
    %v90 = vld [vmem:[#allocation2 + $0x1c] sm:$0xf]
    %v91 = vld [vmem:[#allocation2 + $0x20] sm:$0xf]
    %v92 = vld [vmem:[#allocation2 + $0x24] sm:$0xf]
    %v93 = vld [vmem:[#allocation2 + $0x28] sm:$0xf]
    %v94 = vld [vmem:[#allocation2 + $0x2c] sm:$0xf]
    %v95 = vld [vmem:[#allocation2 + $0x30] sm:$0xf]
    %v96 = vld [vmem:[#allocation2 + $0x34] sm:$0xf]
    %v97 = vld [vmem:[#allocation2 + $0x38] sm:$0xf]
    %v98 = vld [vmem:[#allocation2 + $0x3c] sm:$0xf]
    %v99 = vld [vmem:[#allocation5] sm:$0xf]
    %v100 = vld [vmem:[#allocation5 + $0x4] sm:$0xf]
    %v101 = vld [vmem:[#allocation5 + $0x8] sm:$0xf]
    %v102 = vld [vmem:[#allocation5 + $0xc] sm:$0xf]
    %v103 = vld [vmem:[#allocation5 + $0x10] sm:$0xf]
    %v104 = vld [vmem:[#allocation5 + $0x14] sm:$0xf]
    %v105 = vld [vmem:[#allocation5 + $0x18] sm:$0xf]
    %v106 = vld [vmem:[#allocation5 + $0x1c] sm:$0xf]
    %v107 = vld [vmem:[#allocation5 + $0x20] sm:$0xf]
    %v108 = vld [vmem:[#allocation5 + $0x24] sm:$0xf]
    %v109 = vld [vmem:[#allocation5 + $0x28] sm:$0xf]
    %v110 = vld [vmem:[#allocation5 + $0x2c] sm:$0xf]
    %v111 = vld [vmem:[#allocation5 + $0x30] sm:$0xf]
    %v112 = vld [vmem:[#allocation5 + $0x34] sm:$0xf]
    %v113 = vld [vmem:[#allocation5 + $0x38] sm:$0xf]
    %v114 = vld [vmem:[#allocation5 + $0x3c] sm:$0xf]
    %v115 = vld [vmem:[%s2] sm:$0x1]
    %v117 = vlaneseq
    %v118 = vshrl.u32 %v117, 7
    %v119 = vsub.s32 0, %v118
    %v120 = vrot.slane %v115, %v119
    %v138 = vunpack.c.l.b16 %v83
    %v139 = vunpack.c.l.b16 %v84
    %v140 = vunpack.c.l.b16 %v85
    %v141 = vunpack.c.l.b16 %v86
    %v142 = vunpack.c.l.b16 %v87
    %v143 = vunpack.c.l.b16 %v88
    %v144 = vunpack.c.l.b16 %v89
    %v145 = vunpack.c.l.b16 %v90
    %v146 = vunpack.c.l.b16 %v91
    %v147 = vunpack.c.l.b16 %v92
    %v148 = vunpack.c.l.b16 %v93
    %v149 = vunpack.c.l.b16 %v94
    %v150 = vunpack.c.l.b16 %v95
    %v151 = vunpack.c.l.b16 %v96
    %v152 = vunpack.c.l.b16 %v97
    %v153 = vunpack.c.l.b16 %v98
    %v154 = vpack.c.b16 %v139, %v138
    %v155 = vpack.c.b16 %v141, %v140
    %v156 = vpack.c.b16 %v143, %v142
    %v157 = vpack.c.b16 %v145, %v144
    %v158 = vpack.c.b16 %v147, %v146
    %v159 = vpack.c.b16 %v149, %v148
    %v160 = vpack.c.b16 %v151, %v150
    %v161 = vpack.c.b16 %v153, %v152
    %v186 = vunpack.c.l.b16 %v99
    %v187 = vunpack.c.l.b16 %v100
    %v188 = vunpack.c.l.b16 %v101
    %v189 = vunpack.c.l.b16 %v102
    %v190 = vunpack.c.l.b16 %v103
    %v191 = vunpack.c.l.b16 %v104
    %v192 = vunpack.c.l.b16 %v105
    %v193 = vunpack.c.l.b16 %v106
    %v194 = vunpack.c.l.b16 %v107
    %v195 = vunpack.c.l.b16 %v108
    %v196 = vunpack.c.l.b16 %v109
    %v197 = vunpack.c.l.b16 %v110
    %v198 = vunpack.c.l.b16 %v111
    %v199 = vunpack.c.l.b16 %v112
    %v200 = vunpack.c.l.b16 %v113
    %v201 = vunpack.c.l.b16 %v114
    %v202 = vpack.c.b16 %v187, %v186
    %v203 = vpack.c.b16 %v189, %v188
    %v204 = vpack.c.b16 %v191, %v190
    %v205 = vpack.c.b16 %v193, %v192
    %v206 = vpack.c.b16 %v195, %v194
    %v207 = vpack.c.b16 %v197, %v196
    %v208 = vpack.c.b16 %v199, %v198
    %v209 = vpack.c.b16 %v201, %v200
    %218 = vmatprep.subr.bf16.mxu0 0
    %219 = vmatpush1.bf16.msra.mxu0 %v202
    %220 = vmatprep.subr.bf16.mxu0 0
    %221 = vmatpush1.bf16.msra.mxu0 %v203
    %222 = vmatprep.subr.bf16.mxu0 0
    %223 = vmatpush1.bf16.msra.mxu0 %v204
    %224 = vmatprep.subr.bf16.mxu0 0
    %225 = vmatpush1.bf16.msra.mxu0 %v205
    %226 = vmatprep.subr.bf16.mxu0 0
    %227 = vmatpush1.bf16.msra.mxu0 %v206
    %228 = vmatprep.subr.bf16.mxu0 0
    %229 = vmatpush1.bf16.msra.mxu0 %v207
    %230 = vmatprep.subr.bf16.mxu0 0
    %231 = vmatpush1.bf16.msra.mxu0 %v208
    %232 = vmatprep.subr.bf16.mxu0 0
    %233 = vmatpush1.bf16.msra.mxu0 %v209
    %234 = vmatprep.subr.bf16.mxu0 0
    %235 = vmatpush1.bf16.msra.mxu0 0
    %236 = vmatprep.subr.bf16.mxu0 0
    %237 = vmatpush1.bf16.msra.mxu0 0
    %238 = vmatprep.subr.bf16.mxu0 0
    %239 = vmatpush1.bf16.msra.mxu0 0
    %240 = vmatprep.subr.bf16.mxu0 0
    %241 = vmatpush1.bf16.msra.mxu0 0
    %242 = vmatprep.subr.bf16.mxu0 0
    %243 = vmatpush1.bf16.msra.mxu0 0
    %244 = vmatprep.subr.bf16.mxu0 0
    %245 = vmatpush1.bf16.msra.mxu0 0
    %246 = vmatprep.subr.bf16.mxu0 0
    %247 = vmatpush1.bf16.msra.mxu0 0
    %248 = vmatprep.subr.bf16.mxu0 0
    %249 = vmatpush1.bf16.msra.mxu0 0
    %250 = vmatprep.mubr.bf16.mxu0 0
    %251 = vmatmul.mubr.bf16.gmra.mrb[0].mxu0 %v154
    %v252 = vpop.f32.mrb[0].mxu0
    %v253 = vadd.f32 %v120, %v252
    %v254 = vpop.f32.mrb[0].mxu0
    %v255 = vpop.f32.mrb[0].mxu0
    %v256 = vadd.f32 %v120, %v255
    %v257 = vpop.f32.mrb[0].mxu0
    %258 = vmatprep.mubr.bf16.mxu0 0
    %259 = vmatmul.mubr.bf16.gmra.mrb[0].mxu0 %v155
    %v260 = vpop.f32.mrb[0].mxu0
    %v261 = vadd.f32 %v120, %v260
    %v262 = vpop.f32.mrb[0].mxu0
    %v263 = vpop.f32.mrb[0].mxu0
    %v264 = vadd.f32 %v120, %v263
    %v265 = vpop.f32.mrb[0].mxu0
    %266 = vmatprep.mubr.bf16.mxu0 0
    %267 = vmatmul.mubr.bf16.gmra.mrb[0].mxu0 %v156
    %v268 = vpop.f32.mrb[0].mxu0
    %v269 = vadd.f32 %v120, %v268
    %v270 = vpop.f32.mrb[0].mxu0
    %v271 = vpop.f32.mrb[0].mxu0
    %v272 = vadd.f32 %v120, %v271
    %v273 = vpop.f32.mrb[0].mxu0
    %274 = vmatprep.mubr.bf16.mxu0 0
    %275 = vmatmul.mubr.bf16.gmra.mrb[0].mxu0 %v157
    %v276 = vpop.f32.mrb[0].mxu0
    %v277 = vadd.f32 %v120, %v276
    %v278 = vpop.f32.mrb[0].mxu0
    %v279 = vpop.f32.mrb[0].mxu0
    %v280 = vadd.f32 %v120, %v279
    %v281 = vpop.f32.mrb[0].mxu0
    %282 = vmatprep.mubr.bf16.mxu0 0
    %283 = vmatmul.mubr.bf16.gmra.mrb[0].mxu0 %v158
    %v284 = vpop.f32.mrb[0].mxu0
    %v285 = vadd.f32 %v120, %v284
    %v286 = vpop.f32.mrb[0].mxu0
    %v287 = vpop.f32.mrb[0].mxu0
    %v288 = vadd.f32 %v120, %v287
    %v289 = vpop.f32.mrb[0].mxu0
    %290 = vmatprep.mubr.bf16.mxu0 0
    %291 = vmatmul.mubr.bf16.gmra.mrb[0].mxu0 %v159
    %v292 = vpop.f32.mrb[0].mxu0
    %v293 = vadd.f32 %v120, %v292
    %v294 = vpop.f32.mrb[0].mxu0
    %v295 = vpop.f32.mrb[0].mxu0
    %v296 = vadd.f32 %v120, %v295
    %v297 = vpop.f32.mrb[0].mxu0
    %298 = vmatprep.mubr.bf16.mxu0 0
    %299 = vmatmul.mubr.bf16.gmra.mrb[0].mxu0 %v160
    %v300 = vpop.f32.mrb[0].mxu0
    %v301 = vadd.f32 %v120, %v300
    %v302 = vpop.f32.mrb[0].mxu0
    %v303 = vpop.f32.mrb[0].mxu0
    %v304 = vadd.f32 %v120, %v303
    %v305 = vpop.f32.mrb[0].mxu0
    %306 = vmatprep.mubr.bf16.mxu0 0
    %307 = vmatmul.mubr.bf16.gmra.mrb[0].mxu0 %v161
    %v308 = vpop.f32.mrb[0].mxu0
    %v309 = vadd.f32 %v120, %v308
    %v310 = vpop.f32.mrb[0].mxu0
    %v311 = vpop.f32.mrb[0].mxu0
    %v312 = vadd.f32 %v120, %v311
    %v313 = vpop.f32.mrb[0].mxu0
    %314 = vdwg.mxu0
    %v315 = vpack.c.bf16 %v256, %v253
    %v316 = vpack.c.bf16 %v264, %v261
    %v317 = vpack.c.bf16 %v272, %v269
    %v318 = vpack.c.bf16 %v280, %v277
    %v319 = vpack.c.bf16 %v288, %v285
    %v320 = vpack.c.bf16 %v296, %v293
    %v321 = vpack.c.bf16 %v304, %v301
    %v322 = vpack.c.bf16 %v312, %v309
    %v323 = vld [vmem:[#allocation7] sm:$0xf]
    %v324 = vld [vmem:[#allocation7 + $0x4] sm:$0xf]
    %v325 = vld [vmem:[#allocation7 + $0x8] sm:$0xf]
    %v326 = vld [vmem:[#allocation7 + $0xc] sm:$0xf]
    %v327 = vld [vmem:[#allocation7 + $0x10] sm:$0xf]
    %v328 = vld [vmem:[#allocation7 + $0x14] sm:$0xf]
    %v329 = vld [vmem:[#allocation7 + $0x18] sm:$0xf]
    %v330 = vld [vmem:[#allocation7 + $0x1c] sm:$0xf]
    %v331 = vld [vmem:[#allocation7 + $0x20] sm:$0xf]
    %v332 = vld [vmem:[#allocation7 + $0x24] sm:$0xf]
    %v333 = vld [vmem:[#allocation7 + $0x28] sm:$0xf]
    %v334 = vld [vmem:[#allocation7 + $0x2c] sm:$0xf]
    %v335 = vld [vmem:[#allocation7 + $0x30] sm:$0xf]
    %v336 = vld [vmem:[#allocation7 + $0x34] sm:$0xf]
    %v337 = vld [vmem:[#allocation7 + $0x38] sm:$0xf]
    %v338 = vld [vmem:[#allocation7 + $0x3c] sm:$0xf]
    %v339 = vld [vmem:[%s4] sm:$0x1]
    %v341 = vlaneseq
    %v342 = vshrl.u32 %v341, 7
    %v343 = vsub.s32 0, %v342
    %v344 = vrot.slane %v339, %v343
    %v362 = vunpack.c.l.b16 %v323
    %v363 = vunpack.c.l.b16 %v324
    %v364 = vunpack.c.l.b16 %v325
    %v365 = vunpack.c.l.b16 %v326
    %v366 = vunpack.c.l.b16 %v327
    %v367 = vunpack.c.l.b16 %v328
    %v368 = vunpack.c.l.b16 %v329
    %v369 = vunpack.c.l.b16 %v330
    %v370 = vunpack.c.l.b16 %v331
    %v371 = vunpack.c.l.b16 %v332
    %v372 = vunpack.c.l.b16 %v333
    %v373 = vunpack.c.l.b16 %v334
    %v374 = vunpack.c.l.b16 %v335
    %v375 = vunpack.c.l.b16 %v336
    %v376 = vunpack.c.l.b16 %v337
    %v377 = vunpack.c.l.b16 %v338
    %v378 = vpack.c.b16 %v363, %v362
    %v379 = vpack.c.b16 %v365, %v364
    %v380 = vpack.c.b16 %v367, %v366
    %v381 = vpack.c.b16 %v369, %v368
    %v382 = vpack.c.b16 %v371, %v370
    %v383 = vpack.c.b16 %v373, %v372
    %v384 = vpack.c.b16 %v375, %v374
    %v385 = vpack.c.b16 %v377, %v376
    %394 = vmatprep.subr.bf16.mxu0 0
    %395 = vmatpush1.bf16.msra.mxu0 %v378
    %396 = vmatprep.subr.bf16.mxu0 0
    %397 = vmatpush1.bf16.msra.mxu0 %v379
    %398 = vmatprep.subr.bf16.mxu0 0
    %399 = vmatpush1.bf16.msra.mxu0 %v380
    %400 = vmatprep.subr.bf16.mxu0 0
    %401 = vmatpush1.bf16.msra.mxu0 %v381
    %402 = vmatprep.subr.bf16.mxu0 0
    %403 = vmatpush1.bf16.msra.mxu0 %v382
    %404 = vmatprep.subr.bf16.mxu0 0
    %405 = vmatpush1.bf16.msra.mxu0 %v383
    %406 = vmatprep.subr.bf16.mxu0 0
    %407 = vmatpush1.bf16.msra.mxu0 %v384
    %408 = vmatprep.subr.bf16.mxu0 0
    %409 = vmatpush1.bf16.msra.mxu0 %v385
    %410 = vmatprep.subr.bf16.mxu0 0
    %411 = vmatpush1.bf16.msra.mxu0 0
    %412 = vmatprep.subr.bf16.mxu0 0
    %413 = vmatpush1.bf16.msra.mxu0 0
    %414 = vmatprep.subr.bf16.mxu0 0
    %415 = vmatpush1.bf16.msra.mxu0 0
    %416 = vmatprep.subr.bf16.mxu0 0
    %417 = vmatpush1.bf16.msra.mxu0 0
    %418 = vmatprep.subr.bf16.mxu0 0
    %419 = vmatpush1.bf16.msra.mxu0 0
    %420 = vmatprep.subr.bf16.mxu0 0
    %421 = vmatpush1.bf16.msra.mxu0 0
    %422 = vmatprep.subr.bf16.mxu0 0
    %423 = vmatpush1.bf16.msra.mxu0 0
    %424 = vmatprep.subr.bf16.mxu0 0
    %425 = vmatpush1.bf16.msra.mxu0 0
    %426 = vmatprep.mubr.bf16.mxu0 0
    %427 = vmatmul.mubr.bf16.gmra.mrb[0].mxu0 %v315
    %v428 = vpop.f32.mrb[0].mxu0
    %v429 = vadd.f32 %v344, %v428
    %v430 = vpop.f32.mrb[0].mxu0
    %v431 = vpop.f32.mrb[0].mxu0
    %v432 = vadd.f32 %v344, %v431
    %v433 = vpop.f32.mrb[0].mxu0
    %434 = vmatprep.mubr.bf16.mxu0 0
    %435 = vmatmul.mubr.bf16.gmra.mrb[0].mxu0 %v316
    %v436 = vpop.f32.mrb[0].mxu0
    %v437 = vadd.f32 %v344, %v436
    %v438 = vpop.f32.mrb[0].mxu0
    %v439 = vpop.f32.mrb[0].mxu0
    %v440 = vadd.f32 %v344, %v439
    %v441 = vpop.f32.mrb[0].mxu0
    %442 = vmatprep.mubr.bf16.mxu0 0
    %443 = vmatmul.mubr.bf16.gmra.mrb[0].mxu0 %v317
    %v444 = vpop.f32.mrb[0].mxu0
    %v445 = vadd.f32 %v344, %v444
    %v446 = vpop.f32.mrb[0].mxu0
    %v447 = vpop.f32.mrb[0].mxu0
    %v448 = vadd.f32 %v344, %v447
    %v449 = vpop.f32.mrb[0].mxu0
    %450 = vmatprep.mubr.bf16.mxu0 0
    %451 = vmatmul.mubr.bf16.gmra.mrb[0].mxu0 %v318
    %v452 = vpop.f32.mrb[0].mxu0
    %v453 = vadd.f32 %v344, %v452
    %v454 = vpop.f32.mrb[0].mxu0
    %v455 = vpop.f32.mrb[0].mxu0
    %v456 = vadd.f32 %v344, %v455
    %v457 = vpop.f32.mrb[0].mxu0
    %458 = vmatprep.mubr.bf16.mxu0 0
    %459 = vmatmul.mubr.bf16.gmra.mrb[0].mxu0 %v319
    %v460 = vpop.f32.mrb[0].mxu0
    %v461 = vadd.f32 %v344, %v460
    %v462 = vpop.f32.mrb[0].mxu0
    %v463 = vpop.f32.mrb[0].mxu0
    %v464 = vadd.f32 %v344, %v463
    %v465 = vpop.f32.mrb[0].mxu0
    %466 = vmatprep.mubr.bf16.mxu0 0
    %467 = vmatmul.mubr.bf16.gmra.mrb[0].mxu0 %v320
    %v468 = vpop.f32.mrb[0].mxu0
    %v469 = vadd.f32 %v344, %v468
    %v470 = vpop.f32.mrb[0].mxu0
    %v471 = vpop.f32.mrb[0].mxu0
    %v472 = vadd.f32 %v344, %v471
    %v473 = vpop.f32.mrb[0].mxu0
    %474 = vmatprep.mubr.bf16.mxu0 0
    %475 = vmatmul.mubr.bf16.gmra.mrb[0].mxu0 %v321
    %v476 = vpop.f32.mrb[0].mxu0
    %v477 = vadd.f32 %v344, %v476
    %v478 = vpop.f32.mrb[0].mxu0
    %v479 = vpop.f32.mrb[0].mxu0
    %v480 = vadd.f32 %v344, %v479
    %v481 = vpop.f32.mrb[0].mxu0
    %482 = vmatprep.mubr.bf16.mxu0 0
    %483 = vmatmul.mubr.bf16.gmra.mrb[0].mxu0 %v322
    %v484 = vpop.f32.mrb[0].mxu0
    %v485 = vadd.f32 %v344, %v484
    %v486 = vpop.f32.mrb[0].mxu0
    %v487 = vpop.f32.mrb[0].mxu0
    %v488 = vadd.f32 %v344, %v487
    %v489 = vpop.f32.mrb[0].mxu0
    %490 = vdwg.mxu0
    %v491 = vpack.c.bf16 %v432, %v429
    %v492 = vpack.c.bf16 %v440, %v437
    %v493 = vpack.c.bf16 %v448, %v445
    %v494 = vpack.c.bf16 %v456, %v453
    %v495 = vpack.c.bf16 %v464, %v461
    %v496 = vpack.c.bf16 %v472, %v469
    %v497 = vpack.c.bf16 %v480, %v477
    %v498 = vpack.c.bf16 %v488, %v485
    %v499 = vld [vmem:[#allocation8] sm:$0xf]
    %v500 = vld [vmem:[#allocation8 + $0x4] sm:$0xf]
    %v501 = vld [vmem:[#allocation8 + $0x8] sm:$0xf]
    %v502 = vld [vmem:[#allocation8 + $0xc] sm:$0xf]
    %v503 = vld [vmem:[#allocation8 + $0x10] sm:$0xf]
    %v504 = vld [vmem:[#allocation8 + $0x14] sm:$0xf]
    %v505 = vld [vmem:[#allocation8 + $0x18] sm:$0xf]
    %v506 = vld [vmem:[#allocation8 + $0x1c] sm:$0xf]
    %v507 = vld [vmem:[#allocation8 + $0x20] sm:$0xf]
    %v508 = vld [vmem:[#allocation8 + $0x24] sm:$0xf]
    %v509 = vld [vmem:[#allocation8 + $0x28] sm:$0xf]
    %v510 = vld [vmem:[#allocation8 + $0x2c] sm:$0xf]
    %v511 = vld [vmem:[#allocation8 + $0x30] sm:$0xf]
    %v512 = vld [vmem:[#allocation8 + $0x34] sm:$0xf]
    %v513 = vld [vmem:[#allocation8 + $0x38] sm:$0xf]
    %v514 = vld [vmem:[#allocation8 + $0x3c] sm:$0xf]
    %v515 = vld [vmem:[%s6] sm:$0x1]
    %v517 = vlaneseq
    %v518 = vshrl.u32 %v517, 7
    %v519 = vsub.s32 0, %v518
    %v520 = vrot.slane %v515, %v519
    %v538 = vunpack.c.l.b16 %v499
    %v539 = vunpack.c.l.b16 %v500
    %v540 = vunpack.c.l.b16 %v501
    %v541 = vunpack.c.l.b16 %v502
    %v542 = vunpack.c.l.b16 %v503
    %v543 = vunpack.c.l.b16 %v504
    %v544 = vunpack.c.l.b16 %v505
    %v545 = vunpack.c.l.b16 %v506
    %v546 = vunpack.c.l.b16 %v507
    %v547 = vunpack.c.l.b16 %v508
    %v548 = vunpack.c.l.b16 %v509
    %v549 = vunpack.c.l.b16 %v510
    %v550 = vunpack.c.l.b16 %v511
    %v551 = vunpack.c.l.b16 %v512
    %v552 = vunpack.c.l.b16 %v513
    %v553 = vunpack.c.l.b16 %v514
    %v554 = vpack.c.b16 %v539, %v538
    %v555 = vpack.c.b16 %v541, %v540
    %v556 = vpack.c.b16 %v543, %v542
    %v557 = vpack.c.b16 %v545, %v544
    %v558 = vpack.c.b16 %v547, %v546
    %v559 = vpack.c.b16 %v549, %v548
    %v560 = vpack.c.b16 %v551, %v550
    %v561 = vpack.c.b16 %v553, %v552
    %570 = vmatprep.subr.bf16.mxu0 0
    %571 = vmatpush1.bf16.msra.mxu0 %v554
    %572 = vmatprep.subr.bf16.mxu0 0
    %573 = vmatpush1.bf16.msra.mxu0 %v555
    %574 = vmatprep.subr.bf16.mxu0 0
    %575 = vmatpush1.bf16.msra.mxu0 %v556
    %576 = vmatprep.subr.bf16.mxu0 0
    %577 = vmatpush1.bf16.msra.mxu0 %v557
    %578 = vmatprep.subr.bf16.mxu0 0
    %579 = vmatpush1.bf16.msra.mxu0 %v558
    %580 = vmatprep.subr.bf16.mxu0 0
    %581 = vmatpush1.bf16.msra.mxu0 %v559
    %582 = vmatprep.subr.bf16.mxu0 0
    %583 = vmatpush1.bf16.msra.mxu0 %v560
    %584 = vmatprep.subr.bf16.mxu0 0
    %585 = vmatpush1.bf16.msra.mxu0 %v561
    %586 = vmatprep.subr.bf16.mxu0 0
    %587 = vmatpush1.bf16.msra.mxu0 0
    %588 = vmatprep.subr.bf16.mxu0 0
    %589 = vmatpush1.bf16.msra.mxu0 0
    %590 = vmatprep.subr.bf16.mxu0 0
    %591 = vmatpush1.bf16.msra.mxu0 0
    %592 = vmatprep.subr.bf16.mxu0 0
    %593 = vmatpush1.bf16.msra.mxu0 0
    %594 = vmatprep.subr.bf16.mxu0 0
    %595 = vmatpush1.bf16.msra.mxu0 0
    %596 = vmatprep.subr.bf16.mxu0 0
    %597 = vmatpush1.bf16.msra.mxu0 0
    %598 = vmatprep.subr.bf16.mxu0 0
    %599 = vmatpush1.bf16.msra.mxu0 0
    %600 = vmatprep.subr.bf16.mxu0 0
    %601 = vmatpush1.bf16.msra.mxu0 0
    %602 = vmatprep.mubr.bf16.mxu0 0
    %603 = vmatmul.mubr.bf16.gmra.mrb[0].mxu0 %v491
    %v604 = vpop.f32.mrb[0].mxu0
    %v605 = vadd.f32 %v520, %v604
    %v606 = vpop.f32.mrb[0].mxu0
    %v607 = vpop.f32.mrb[0].mxu0
    %v608 = vadd.f32 %v520, %v607
    %v609 = vpop.f32.mrb[0].mxu0
    %610 = vmatprep.mubr.bf16.mxu0 0
    %611 = vmatmul.mubr.bf16.gmra.mrb[0].mxu0 %v492
    %v612 = vpop.f32.mrb[0].mxu0
    %v613 = vadd.f32 %v520, %v612
    %v614 = vpop.f32.mrb[0].mxu0
    %v615 = vpop.f32.mrb[0].mxu0
    %v616 = vadd.f32 %v520, %v615
    %v617 = vpop.f32.mrb[0].mxu0
    %618 = vmatprep.mubr.bf16.mxu0 0
    %619 = vmatmul.mubr.bf16.gmra.mrb[0].mxu0 %v493
    %v620 = vpop.f32.mrb[0].mxu0
    %v621 = vadd.f32 %v520, %v620
    %v622 = vpop.f32.mrb[0].mxu0
    %v623 = vpop.f32.mrb[0].mxu0
    %v624 = vadd.f32 %v520, %v623
    %v625 = vpop.f32.mrb[0].mxu0
    %626 = vmatprep.mubr.bf16.mxu0 0
    %627 = vmatmul.mubr.bf16.gmra.mrb[0].mxu0 %v494
    %v628 = vpop.f32.mrb[0].mxu0
    %v629 = vadd.f32 %v520, %v628
    %v630 = vpop.f32.mrb[0].mxu0
    %v631 = vpop.f32.mrb[0].mxu0
    %v632 = vadd.f32 %v520, %v631
    %v633 = vpop.f32.mrb[0].mxu0
    %634 = vmatprep.mubr.bf16.mxu0 0
    %635 = vmatmul.mubr.bf16.gmra.mrb[0].mxu0 %v495
    %v636 = vpop.f32.mrb[0].mxu0
    %v637 = vadd.f32 %v520, %v636
    %v638 = vpop.f32.mrb[0].mxu0
    %v639 = vpop.f32.mrb[0].mxu0
    %v640 = vadd.f32 %v520, %v639
    %v641 = vpop.f32.mrb[0].mxu0
    %642 = vmatprep.mubr.bf16.mxu0 0
    %643 = vmatmul.mubr.bf16.gmra.mrb[0].mxu0 %v496
    %v644 = vpop.f32.mrb[0].mxu0
    %v645 = vadd.f32 %v520, %v644
    %v646 = vpop.f32.mrb[0].mxu0
    %v647 = vpop.f32.mrb[0].mxu0
    %v648 = vadd.f32 %v520, %v647
    %v649 = vpop.f32.mrb[0].mxu0
    %650 = vmatprep.mubr.bf16.mxu0 0
    %651 = vmatmul.mubr.bf16.gmra.mrb[0].mxu0 %v497
    %v652 = vpop.f32.mrb[0].mxu0
    %v653 = vadd.f32 %v520, %v652
    %v654 = vpop.f32.mrb[0].mxu0
    %v655 = vpop.f32.mrb[0].mxu0
    %v656 = vadd.f32 %v520, %v655
    %v657 = vpop.f32.mrb[0].mxu0
    %658 = vmatprep.mubr.bf16.mxu0 0
    %659 = vmatmul.mubr.bf16.gmra.mrb[0].mxu0 %v498
    %v660 = vpop.f32.mrb[0].mxu0
    %v661 = vadd.f32 %v520, %v660
    %v662 = vpop.f32.mrb[0].mxu0
    %v663 = vpop.f32.mrb[0].mxu0
    %v664 = vadd.f32 %v520, %v663
    %v665 = vpop.f32.mrb[0].mxu0
    %666 = vdwg.mxu0
    %v667 = vpack.c.bf16 %v608, %v605
    %v668 = vpack.c.bf16 %v616, %v613
    %v669 = vpack.c.bf16 %v624, %v621
    %v670 = vpack.c.bf16 %v632, %v629
    %v671 = vpack.c.bf16 %v640, %v637
    %v672 = vpack.c.bf16 %v648, %v645
    %v673 = vpack.c.bf16 %v656, %v653
    %v674 = vpack.c.bf16 %v664, %v661
    %v683 = vunpack.c.l.b16 %v667
    %v684 = vunpack.c.h.b16 %v667
    %v685 = vunpack.c.l.b16 %v668
    %v686 = vunpack.c.h.b16 %v668
    %v687 = vunpack.c.l.b16 %v669
    %v688 = vunpack.c.h.b16 %v669
    %v689 = vunpack.c.l.b16 %v670
    %v690 = vunpack.c.h.b16 %v670
    %v691 = vunpack.c.l.b16 %v671
    %v692 = vunpack.c.h.b16 %v671
    %v693 = vunpack.c.l.b16 %v672
    %v694 = vunpack.c.h.b16 %v672
    %v695 = vunpack.c.l.b16 %v673
    %v696 = vunpack.c.h.b16 %v673
    %v697 = vunpack.c.l.b16 %v674
    %v698 = vunpack.c.h.b16 %v674
    %v699 = vpack.c.b16 %v683, %v683
    %v700 = vpack.c.b16 %v684, %v684
    %v701 = vpack.c.b16 %v685, %v685
    %v702 = vpack.c.b16 %v686, %v686
    %v703 = vpack.c.b16 %v687, %v687
    %v704 = vpack.c.b16 %v688, %v688
    %v705 = vpack.c.b16 %v689, %v689
    %v706 = vpack.c.b16 %v690, %v690
    %v707 = vpack.c.b16 %v691, %v691
    %v708 = vpack.c.b16 %v692, %v692
    %v709 = vpack.c.b16 %v693, %v693
    %v710 = vpack.c.b16 %v694, %v694
    %v711 = vpack.c.b16 %v695, %v695
    %v712 = vpack.c.b16 %v696, %v696
    %v713 = vpack.c.b16 %v697, %v697
    %v714 = vpack.c.b16 %v698, %v698
    %731 = vst [vmem:[#allocation10] sm:$0xf] %v699
    %732 = vst [vmem:[#allocation10 + $0x4] sm:$0xf] %v700
    %733 = vst [vmem:[#allocation10 + $0x8] sm:$0xf] %v701
    %734 = vst [vmem:[#allocation10 + $0xc] sm:$0xf] %v702
    %735 = vst [vmem:[#allocation10 + $0x10] sm:$0xf] %v703
    %736 = vst [vmem:[#allocation10 + $0x14] sm:$0xf] %v704
    %737 = vst [vmem:[#allocation10 + $0x18] sm:$0xf] %v705
    %738 = vst [vmem:[#allocation10 + $0x1c] sm:$0xf] %v706
    %739 = vst [vmem:[#allocation10 + $0x20] sm:$0xf] %v707
    %740 = vst [vmem:[#allocation10 + $0x24] sm:$0xf] %v708
    %741 = vst [vmem:[#allocation10 + $0x28] sm:$0xf] %v709
    %742 = vst [vmem:[#allocation10 + $0x2c] sm:$0xf] %v710
    %743 = vst [vmem:[#allocation10 + $0x30] sm:$0xf] %v711
    %744 = vst [vmem:[#allocation10 + $0x34] sm:$0xf] %v712
    %745 = vst [vmem:[#allocation10 + $0x38] sm:$0xf] %v713
    %746 = vst [vmem:[#allocation10 + $0x3c] sm:$0xf] %v714
    // Predicated region
    $region46: #{tpu_custom_call.1} parent=1 // pred_check
      _
    $region47: #{tpu_custom_call.1} parent=1 // pred_check_branch
      %748 = sbr.rel (0) target = $region49
    $region48: #{tpu_custom_call.1} parent=1 // pred_region
      %s750 = ssub.s32 1024, 1024
      %751 = vsyncadd [#allocation4], %s750
      %s752 = sshll.u32 [#allocation10], 4
      %s753 = int_to_ptr.vmem [resolvable:$true] %s752
      %758 = dma.vmem_to_hbm [thread:$0]  %s753, 1024, %s7, [#allocation4], 64, 64, 4
    $region49: #{tpu_custom_call.1} parent=1 // pred_fallthru
      _
    // Predicated region
    $region50: #{tpu_custom_call.1} parent=1 // pred_check
      _
    $region51: #{tpu_custom_call.1} parent=1 // pred_check_branch
      %760 = sbr.rel (0) target = $region53
    $region52: #{tpu_custom_call.1} parent=1 // pred_region
      %761 = dma.done [#allocation4], 1024
    $region53: #{tpu_custom_call.1} parent=1 // pred_fallthru
      _
    %762 = vsyncpa [#allocation3], 1
    %763 = vsyncpa [#allocation6], 1
    %764 = vsyncpa [#allocation9], 1
    %765 = vsyncpa [#allocation4], 1

</llo_original>
